<compile_context>
chip_gen: v6e
topology: v6e:2x2x1
jax: 0.10.0
libtpu: 0.0.40
codegen_flags: <defaults>
</compile_context>

<pallas_src>
import functools

import jax
import jax.numpy as jnp
from jax.experimental import pallas as pl
from jax.experimental.pallas import tpu as pltpu


# ------------------------------- kernel --------------------------------- #
def rnn_kernel(obs_ref, h0_ref, w1_ref, b1_ref, wih_ref, bi_ref,
               whh_ref, bhn_ref, whead_ref, bhead_ref,
               h_ref, qv_ref):
    """Whole forward in one invocation.

    obs_ref  : (T*B, D)   time-major flattened observations
    h0_ref   : (B, H)     initial GRU hidden state
    w1_ref   : (D, H),  b1_ref: (1, H)                 fc1
    wih_ref  : (H, 3H), bi_ref: (1, 3H)  input gates [r|z|n]; bias pre-summed for r,z
    whh_ref  : (H, 3H), bhn_ref: (1, H)  hidden gates [r|z|n]; b_hn kept separate
    whead_ref: (H, A+1), bhead_ref: (1, A+1)            fused fc2 | v_fc
    h_ref    : (T*B, H)   hidden sequence output (time-major)
    qv_ref   : (T*B, A+1) fused q|v head output (time-major)
    """
    TB = obs_ref.shape[0]
    B, H = h0_ref.shape
    T = TB // B

    # ---- hoisted non-recurrent work: fc1 + ReLU + input-side gate proj ----
    x = jnp.dot(obs_ref[...], w1_ref[...],
                preferred_element_type=jnp.float32) + b1_ref[...]
    x = jnp.maximum(x, 0.0)                                              # (T*B, H)
    gi = jnp.dot(x, wih_ref[...],
                 preferred_element_type=jnp.float32) + bi_ref[...]       # (T*B, 3H)

    whh = whh_ref[...]        # (H, 3H)
    bhn = bhn_ref[...]        # (1, H)

    # ---- serial GRU recurrence: one fused (B,H)@(H,3H) matmul per step ----
    # PyTorch GRU:
    #   r = sigmoid(W_ir x + b_ir + W_hr h + b_hr)
    #   z = sigmoid(W_iz x + b_iz + W_hz h + b_hz)
    #   n = tanh  (W_in x + b_in + r * (W_hn h + b_hn))
    #   h = (1 - z) * n + z * h
    h = h0_ref[...]
    hs = []
    for t in range(T):                                   # T is static -> full unroll
        gi_t = gi[t * B:(t + 1) * B, :]                                  # (B, 3H)
        gh = jnp.dot(h, whh, preferred_element_type=jnp.float32)        # (B, 3H)
        r = jax.nn.sigmoid(gi_t[:, 0:H] + gh[:, 0:H])
        z = jax.nn.sigmoid(gi_t[:, H:2 * H] + gh[:, H:2 * H])
        n = jnp.tanh(gi_t[:, 2 * H:3 * H] + r * (gh[:, 2 * H:3 * H] + bhn))
        h = (1.0 - z) * n + z * h
        hs.append(h)

    hseq = jnp.concatenate(hs, axis=0)                                   # (T*B, H)
    h_ref[...] = hseq.astype(h_ref.dtype)

    # ---- fused output heads, post-hoc over the whole sequence ----
    qv = jnp.dot(hseq, whead_ref[...],
                 preferred_element_type=jnp.float32) + bhead_ref[...]
    qv_ref[...] = qv.astype(qv_ref.dtype)


# ------------------------------- wrapper -------------------------------- #
def rnn_forward(obs, hidden_state, params, n_agents, n_actions):
    """obs: (B, T, D) f32, hidden_state: (1, B, H) f32 (PyTorch GRU convention)."""
    B, T, D = obs.shape
    H = params["w1"].shape[0]
    A = params["w2"].shape[0]          # n_agents * n_actions
    f32 = jnp.float32

    # time-major flattened obs: rows ordered [t0b0, t0b1, t1b0, t1b1, ...]
    obs_tm = jnp.transpose(obs, (1, 0, 2)).reshape(T * B, D).astype(f32)
    h0 = hidden_state[0].astype(f32)

    wih = params["wih"].astype(f32)    # (3H, H) rows [W_ir; W_iz; W_in]
    whh = params["whh"].astype(f32)
    bih = params["bih"].astype(f32)
    bhh = params["bhh"].astype(f32)

    wih_cat = wih.T                    # (H, 3H) columns [W_ir^T | W_iz^T | W_in^T]
    whh_cat = whh.T                    # (H, 3H)
    bi_cat = jnp.concatenate(
        [bih[0:H] + bhh[0:H],          # b_ir + b_hr
         bih[H:2 * H] + bhh[H:2 * H],  # b_iz + b_hz
         bih[2 * H:3 * H]]             # b_in (b_hn stays separate)
    ).reshape(1, 3 * H)
    bhn = bhh[2 * H:3 * H].reshape(1, H)

    w1 = params["w1"].T.astype(f32)    # (D, H)
    b1 = params["b1"].reshape(1, H).astype(f32)

    # fused heads: q columns [0:A], v column [A]
    whead = jnp.concatenate([params["w2"].T, params["wv"].T], axis=1).astype(f32)  # (H, A+1)
    bhead = jnp.concatenate([params["b2"], params["bv"]]).reshape(1, A + 1).astype(f32)

    vmem = pl.BlockSpec(memory_space=pltpu.MemorySpace.VMEM)  # whole array, VMEM-resident

    h_flat, qv_flat = pl.pallas_call(
        rnn_kernel,
        out_shape=(jax.ShapeDtypeStruct((T * B, H), f32),
                   jax.ShapeDtypeStruct((T * B, A + 1), f32)),
        in_specs=[vmem] * 10,
        out_specs=(vmem, vmem),
    )(obs_tm, h0, w1, b1, wih_cat, bi_cat, whh_cat, bhn, whead, bhead)

    # tiny (a few KB) transposes back to batch_first; negligible vs. kernel cost
    h = jnp.transpose(h_flat.reshape(T, B, H), (1, 0, 2))               # (B, T, H)
    qv = jnp.transpose(qv_flat.reshape(T, B, A + 1), (1, 0, 2))         # (B, T, A+1)
    q = qv[..., :A].reshape(B, T, n_agents, n_actions)
    v = qv[..., A:]
    return q, h, v


# --------------------------- pure-JAX reference -------------------------- #
def rnn_forward_ref(obs, hidden_state, p, n_agents, n_actions):
    B, T, D = obs.shape
    H = p["w1"].shape[0]
    x = jax.nn.relu(jnp.einsum("btd,hd->bth", obs, p["w1"]) + p["b1"])
    h = hidden_state[0]
    wih, whh, bih, bhh = p["wih"], p["whh"], p["bih"], p["bhh"]
    hs = []
    for t in range(T):
        xt = x[:, t]
        gi = xt @ wih.T + bih
        gh = h @ whh.T + bhh
        r = jax.nn.sigmoid(gi[:, 0:H] + gh[:, 0:H])
        z = jax.nn.sigmoid(gi[:, H:2 * H] + gh[:, H:2 * H])
        n = jnp.tanh(gi[:, 2 * H:] + r * gh[:, 2 * H:])
        h = (1.0 - z) * n + z * h
        hs.append(h)
    hseq = jnp.stack(hs, axis=1)
    q = hseq @ p["w2"].T + p["b2"]
    v = hseq @ p["wv"].T + p["bv"]
    return q.reshape(B, T, n_agents, n_actions), hseq, v


# --------------------------------- main ---------------------------------- #
if __name__ == "__main__":
    B, T = 2, 8
    input_shape = 16
    rnn_hidden_dim = 32
    n_agents, n_actions = 2, 4
    A = n_agents * n_actions

    key = jax.random.PRNGKey(0)
    ks = jax.random.split(key, 12)

    def u(k, shape, scale=0.1):
        return jax.random.uniform(k, shape, jnp.float32, -scale, scale)

    params = {
        "w1": u(ks[0], (rnn_hidden_dim, input_shape)),
        "b1": u(ks[1], (rnn_hidden_dim,)),
        "wih": u(ks[2], (3 * rnn_hidden_dim, rnn_hidden_dim)),
        "whh": u(ks[3], (3 * rnn_hidden_dim, rnn_hidden_dim)),
        "bih": u(ks[4], (3 * rnn_hidden_dim,)),
        "bhh": u(ks[5], (3 * rnn_hidden_dim,)),
        "w2": u(ks[6], (A, rnn_hidden_dim)),
        "b2": u(ks[7], (A,)),
        "wv": u(ks[8], (1, rnn_hidden_dim)),
        "bv": u(ks[9], (1,)),
    }

    obs = jax.random.normal(ks[10], (B, T, input_shape), jnp.float32)
    hidden_state = jax.random.normal(ks[11], (1, B, rnn_hidden_dim), jnp.float32)

    run = jax.jit(functools.partial(rnn_forward,
                                    n_agents=n_agents, n_actions=n_actions))
    q, h, v = run(obs, hidden_state, params)
    jax.block_until_ready((q, h, v))

    q_r, h_r, v_r = rnn_forward_ref(obs, hidden_state, params, n_agents, n_actions)
    assert q.shape == (B, T, n_agents, n_actions)
    assert h.shape == (B, T, rnn_hidden_dim)
    assert v.shape == (B, T, 1)
    assert jnp.allclose(q, q_r, atol=1e-5), "q mismatch"
    assert jnp.allclose(h, h_r, atol=1e-5), "h mismatch"
    assert jnp.allclose(v, v_r, atol=1e-5), "v mismatch"

    print("KERNEL_OK")
</pallas_src>

<mosaic_0001>
module attributes {stable_mosaic.version = 11 : i64} {
  func.func @rnn_kernel(%arg0: memref<16x16xf32, #tpu.memory_space<vmem>>, %arg1: memref<2x32xf32, #tpu.memory_space<vmem>>, %arg2: memref<16x32xf32, #tpu.memory_space<vmem>>, %arg3: memref<1x32xf32, #tpu.memory_space<vmem>>, %arg4: memref<32x96xf32, #tpu.memory_space<vmem>>, %arg5: memref<1x96xf32, #tpu.memory_space<vmem>>, %arg6: memref<32x96xf32, #tpu.memory_space<vmem>>, %arg7: memref<1x32xf32, #tpu.memory_space<vmem>>, %arg8: memref<32x9xf32, #tpu.memory_space<vmem>>, %arg9: memref<1x9xf32, #tpu.memory_space<vmem>>, %arg10: memref<16x32xf32, #tpu.memory_space<vmem>>, %arg11: memref<16x9xf32, #tpu.memory_space<vmem>>) attributes {dimension_semantics = [], scalar_prefetch = 0 : i64, scratch_operands = 0 : i64, tpu.core_type = #tpu.core_type<tc>} {
    %c0 = arith.constant 0 : index
    %c0_0 = arith.constant 0 : index
    %0 = vector.load %arg0[%c0, %c0_0] : memref<16x16xf32, #tpu.memory_space<vmem>>, vector<16x16xf32>
    %c0_1 = arith.constant 0 : index
    %c0_2 = arith.constant 0 : index
    %1 = vector.load %arg2[%c0_1, %c0_2] : memref<16x32xf32, #tpu.memory_space<vmem>>, vector<16x32xf32>
    %cst = arith.constant dense<0.000000e+00> : vector<16x32xf32>
    %2 = tpu.matmul %0, %1, %cst {dimension_numbers = #tpu.dot_dimension_numbers<[1], [0], [0], [1], [0, 0, 1, 1], [], []>} : vector<16x16xf32>, vector<16x32xf32>, vector<16x32xf32> -> vector<16x32xf32>
    %c0_3 = arith.constant 0 : index
    %c0_4 = arith.constant 0 : index
    %3 = vector.load %arg3[%c0_3, %c0_4] : memref<1x32xf32, #tpu.memory_space<vmem>>, vector<1x32xf32>
    %4 = vector.broadcast %3 : vector<1x32xf32> to vector<16x32xf32>
    %5 = arith.addf %2, %4 : vector<16x32xf32>
    %cst_5 = arith.constant 0.000000e+00 : f32
    %6 = vector.broadcast %cst_5 : f32 to vector<16x32xf32>
    %7 = arith.maximumf %5, %6 : vector<16x32xf32>
    %c0_6 = arith.constant 0 : index
    %c0_7 = arith.constant 0 : index
    %8 = vector.load %arg4[%c0_6, %c0_7] : memref<32x96xf32, #tpu.memory_space<vmem>>, vector<32x96xf32>
    %cst_8 = arith.constant dense<0.000000e+00> : vector<16x96xf32>
    %9 = tpu.matmul %7, %8, %cst_8 {dimension_numbers = #tpu.dot_dimension_numbers<[1], [0], [0], [1], [0, 0, 1, 1], [], []>} : vector<16x32xf32>, vector<32x96xf32>, vector<16x96xf32> -> vector<16x96xf32>
    %c0_9 = arith.constant 0 : index
    %c0_10 = arith.constant 0 : index
    %10 = vector.load %arg5[%c0_9, %c0_10] : memref<1x96xf32, #tpu.memory_space<vmem>>, vector<1x96xf32>
    %11 = vector.broadcast %10 : vector<1x96xf32> to vector<16x96xf32>
    %12 = arith.addf %9, %11 : vector<16x96xf32>
    %c0_11 = arith.constant 0 : index
    %c0_12 = arith.constant 0 : index
    %13 = vector.load %arg6[%c0_11, %c0_12] : memref<32x96xf32, #tpu.memory_space<vmem>>, vector<32x96xf32>
    %c0_13 = arith.constant 0 : index
    %c0_14 = arith.constant 0 : index
    %14 = vector.load %arg7[%c0_13, %c0_14] : memref<1x32xf32, #tpu.memory_space<vmem>>, vector<1x32xf32>
    %c0_15 = arith.constant 0 : index
    %c0_16 = arith.constant 0 : index
    %15 = vector.load %arg1[%c0_15, %c0_16] : memref<2x32xf32, #tpu.memory_space<vmem>>, vector<2x32xf32>
    %16 = vector.extract_strided_slice %12 {offsets = [0, 0], sizes = [2, 96], strides = [1, 1]} : vector<16x96xf32> to vector<2x96xf32>
    %cst_17 = arith.constant dense<0.000000e+00> : vector<2x96xf32>
    %17 = tpu.matmul %15, %13, %cst_17 {dimension_numbers = #tpu.dot_dimension_numbers<[1], [0], [0], [1], [0, 0, 1, 1], [], []>} : vector<2x32xf32>, vector<32x96xf32>, vector<2x96xf32> -> vector<2x96xf32>
    %18 = vector.extract_strided_slice %16 {offsets = [0, 0], sizes = [2, 32], strides = [1, 1]} : vector<2x96xf32> to vector<2x32xf32>
    %19 = vector.extract_strided_slice %17 {offsets = [0, 0], sizes = [2, 32], strides = [1, 1]} : vector<2x96xf32> to vector<2x32xf32>
    %20 = arith.addf %18, %19 : vector<2x32xf32>
    %21 = arith.negf %20 : vector<2x32xf32>
    %22 = math.exp %21 : vector<2x32xf32>
    %cst_18 = arith.constant 1.000000e+00 : f32
    %23 = vector.broadcast %cst_18 : f32 to vector<2x32xf32>
    %24 = arith.addf %23, %22 : vector<2x32xf32>
    %25 = arith.divf %23, %24 : vector<2x32xf32>
    %26 = vector.extract_strided_slice %16 {offsets = [0, 32], sizes = [2, 32], strides = [1, 1]} : vector<2x96xf32> to vector<2x32xf32>
    %27 = vector.extract_strided_slice %17 {offsets = [0, 32], sizes = [2, 32], strides = [1, 1]} : vector<2x96xf32> to vector<2x32xf32>
    %28 = arith.addf %26, %27 : vector<2x32xf32>
    %29 = arith.negf %28 : vector<2x32xf32>
    %30 = math.exp %29 : vector<2x32xf32>
    %cst_19 = arith.constant 1.000000e+00 : f32
    %31 = vector.broadcast %cst_19 : f32 to vector<2x32xf32>
    %32 = arith.addf %31, %30 : vector<2x32xf32>
    %33 = arith.divf %31, %32 : vector<2x32xf32>
    %34 = vector.extract_strided_slice %16 {offsets = [0, 64], sizes = [2, 32], strides = [1, 1]} : vector<2x96xf32> to vector<2x32xf32>
    %35 = vector.extract_strided_slice %17 {offsets = [0, 64], sizes = [2, 32], strides = [1, 1]} : vector<2x96xf32> to vector<2x32xf32>
    %36 = vector.broadcast %14 : vector<1x32xf32> to vector<2x32xf32>
    %37 = arith.addf %35, %36 : vector<2x32xf32>
    %38 = arith.mulf %25, %37 : vector<2x32xf32>
    %39 = arith.addf %34, %38 : vector<2x32xf32>
    %40 = math.tanh %39 : vector<2x32xf32>
    %cst_20 = arith.constant 1.000000e+00 : f32
    %41 = vector.broadcast %cst_20 : f32 to vector<2x32xf32>
    %42 = arith.subf %41, %33 : vector<2x32xf32>
    %43 = arith.mulf %42, %40 : vector<2x32xf32>
    %44 = arith.mulf %33, %15 : vector<2x32xf32>
    %45 = arith.addf %43, %44 : vector<2x32xf32>
    %46 = vector.extract_strided_slice %12 {offsets = [2, 0], sizes = [2, 96], strides = [1, 1]} : vector<16x96xf32> to vector<2x96xf32>
    %cst_21 = arith.constant dense<0.000000e+00> : vector<2x96xf32>
    %47 = tpu.matmul %45, %13, %cst_21 {dimension_numbers = #tpu.dot_dimension_numbers<[1], [0], [0], [1], [0, 0, 1, 1], [], []>} : vector<2x32xf32>, vector<32x96xf32>, vector<2x96xf32> -> vector<2x96xf32>
    %48 = vector.extract_strided_slice %46 {offsets = [0, 0], sizes = [2, 32], strides = [1, 1]} : vector<2x96xf32> to vector<2x32xf32>
    %49 = vector.extract_strided_slice %47 {offsets = [0, 0], sizes = [2, 32], strides = [1, 1]} : vector<2x96xf32> to vector<2x32xf32>
    %50 = arith.addf %48, %49 : vector<2x32xf32>
    %51 = arith.negf %50 : vector<2x32xf32>
    %52 = math.exp %51 : vector<2x32xf32>
    %cst_22 = arith.constant 1.000000e+00 : f32
    %53 = vector.broadcast %cst_22 : f32 to vector<2x32xf32>
    %54 = arith.addf %53, %52 : vector<2x32xf32>
    %55 = arith.divf %53, %54 : vector<2x32xf32>
    %56 = vector.extract_strided_slice %46 {offsets = [0, 32], sizes = [2, 32], strides = [1, 1]} : vector<2x96xf32> to vector<2x32xf32>
    %57 = vector.extract_strided_slice %47 {offsets = [0, 32], sizes = [2, 32], strides = [1, 1]} : vector<2x96xf32> to vector<2x32xf32>
    %58 = arith.addf %56, %57 : vector<2x32xf32>
    %59 = arith.negf %58 : vector<2x32xf32>
    %60 = math.exp %59 : vector<2x32xf32>
    %cst_23 = arith.constant 1.000000e+00 : f32
    %61 = vector.broadcast %cst_23 : f32 to vector<2x32xf32>
    %62 = arith.addf %61, %60 : vector<2x32xf32>
    %63 = arith.divf %61, %62 : vector<2x32xf32>
    %64 = vector.extract_strided_slice %46 {offsets = [0, 64], sizes = [2, 32], strides = [1, 1]} : vector<2x96xf32> to vector<2x32xf32>
    %65 = vector.extract_strided_slice %47 {offsets = [0, 64], sizes = [2, 32], strides = [1, 1]} : vector<2x96xf32> to vector<2x32xf32>
    %66 = vector.broadcast %14 : vector<1x32xf32> to vector<2x32xf32>
    %67 = arith.addf %65, %66 : vector<2x32xf32>
    %68 = arith.mulf %55, %67 : vector<2x32xf32>
    %69 = arith.addf %64, %68 : vector<2x32xf32>
    %70 = math.tanh %69 : vector<2x32xf32>
    %cst_24 = arith.constant 1.000000e+00 : f32
    %71 = vector.broadcast %cst_24 : f32 to vector<2x32xf32>
    %72 = arith.subf %71, %63 : vector<2x32xf32>
    %73 = arith.mulf %72, %70 : vector<2x32xf32>
    %74 = arith.mulf %63, %45 : vector<2x32xf32>
    %75 = arith.addf %73, %74 : vector<2x32xf32>
    %76 = vector.extract_strided_slice %12 {offsets = [4, 0], sizes = [2, 96], strides = [1, 1]} : vector<16x96xf32> to vector<2x96xf32>
    %cst_25 = arith.constant dense<0.000000e+00> : vector<2x96xf32>
    %77 = tpu.matmul %75, %13, %cst_25 {dimension_numbers = #tpu.dot_dimension_numbers<[1], [0], [0], [1], [0, 0, 1, 1], [], []>} : vector<2x32xf32>, vector<32x96xf32>, vector<2x96xf32> -> vector<2x96xf32>
    %78 = vector.extract_strided_slice %76 {offsets = [0, 0], sizes = [2, 32], strides = [1, 1]} : vector<2x96xf32> to vector<2x32xf32>
    %79 = vector.extract_strided_slice %77 {offsets = [0, 0], sizes = [2, 32], strides = [1, 1]} : vector<2x96xf32> to vector<2x32xf32>
    %80 = arith.addf %78, %79 : vector<2x32xf32>
    %81 = arith.negf %80 : vector<2x32xf32>
    %82 = math.exp %81 : vector<2x32xf32>
    %cst_26 = arith.constant 1.000000e+00 : f32
    %83 = vector.broadcast %cst_26 : f32 to vector<2x32xf32>
    %84 = arith.addf %83, %82 : vector<2x32xf32>
    %85 = arith.divf %83, %84 : vector<2x32xf32>
    %86 = vector.extract_strided_slice %76 {offsets = [0, 32], sizes = [2, 32], strides = [1, 1]} : vector<2x96xf32> to vector<2x32xf32>
    %87 = vector.extract_strided_slice %77 {offsets = [0, 32], sizes = [2, 32], strides = [1, 1]} : vector<2x96xf32> to vector<2x32xf32>
    %88 = arith.addf %86, %87 : vector<2x32xf32>
    %89 = arith.negf %88 : vector<2x32xf32>
    %90 = math.exp %89 : vector<2x32xf32>
    %cst_27 = arith.constant 1.000000e+00 : f32
    %91 = vector.broadcast %cst_27 : f32 to vector<2x32xf32>
    %92 = arith.addf %91, %90 : vector<2x32xf32>
    %93 = arith.divf %91, %92 : vector<2x32xf32>
    %94 = vector.extract_strided_slice %76 {offsets = [0, 64], sizes = [2, 32], strides = [1, 1]} : vector<2x96xf32> to vector<2x32xf32>
    %95 = vector.extract_strided_slice %77 {offsets = [0, 64], sizes = [2, 32], strides = [1, 1]} : vector<2x96xf32> to vector<2x32xf32>
    %96 = vector.broadcast %14 : vector<1x32xf32> to vector<2x32xf32>
    %97 = arith.addf %95, %96 : vector<2x32xf32>
    %98 = arith.mulf %85, %97 : vector<2x32xf32>
    %99 = arith.addf %94, %98 : vector<2x32xf32>
    %100 = math.tanh %99 : vector<2x32xf32>
    %cst_28 = arith.constant 1.000000e+00 : f32
    %101 = vector.broadcast %cst_28 : f32 to vector<2x32xf32>
    %102 = arith.subf %101, %93 : vector<2x32xf32>
    %103 = arith.mulf %102, %100 : vector<2x32xf32>
    %104 = arith.mulf %93, %75 : vector<2x32xf32>
    %105 = arith.addf %103, %104 : vector<2x32xf32>
    %106 = vector.extract_strided_slice %12 {offsets = [6, 0], sizes = [2, 96], strides = [1, 1]} : vector<16x96xf32> to vector<2x96xf32>
    %cst_29 = arith.constant dense<0.000000e+00> : vector<2x96xf32>
    %107 = tpu.matmul %105, %13, %cst_29 {dimension_numbers = #tpu.dot_dimension_numbers<[1], [0], [0], [1], [0, 0, 1, 1], [], []>} : vector<2x32xf32>, vector<32x96xf32>, vector<2x96xf32> -> vector<2x96xf32>
    %108 = vector.extract_strided_slice %106 {offsets = [0, 0], sizes = [2, 32], strides = [1, 1]} : vector<2x96xf32> to vector<2x32xf32>
    %109 = vector.extract_strided_slice %107 {offsets = [0, 0], sizes = [2, 32], strides = [1, 1]} : vector<2x96xf32> to vector<2x32xf32>
    %110 = arith.addf %108, %109 : vector<2x32xf32>
    %111 = arith.negf %110 : vector<2x32xf32>
    %112 = math.exp %111 : vector<2x32xf32>
    %cst_30 = arith.constant 1.000000e+00 : f32
    %113 = vector.broadcast %cst_30 : f32 to vector<2x32xf32>
    %114 = arith.addf %113, %112 : vector<2x32xf32>
    %115 = arith.divf %113, %114 : vector<2x32xf32>
    %116 = vector.extract_strided_slice %106 {offsets = [0, 32], sizes = [2, 32], strides = [1, 1]} : vector<2x96xf32> to vector<2x32xf32>
    %117 = vector.extract_strided_slice %107 {offsets = [0, 32], sizes = [2, 32], strides = [1, 1]} : vector<2x96xf32> to vector<2x32xf32>
    %118 = arith.addf %116, %117 : vector<2x32xf32>
    %119 = arith.negf %118 : vector<2x32xf32>
    %120 = math.exp %119 : vector<2x32xf32>
    %cst_31 = arith.constant 1.000000e+00 : f32
    %121 = vector.broadcast %cst_31 : f32 to vector<2x32xf32>
    %122 = arith.addf %121, %120 : vector<2x32xf32>
    %123 = arith.divf %121, %122 : vector<2x32xf32>
    %124 = vector.extract_strided_slice %106 {offsets = [0, 64], sizes = [2, 32], strides = [1, 1]} : vector<2x96xf32> to vector<2x32xf32>
    %125 = vector.extract_strided_slice %107 {offsets = [0, 64], sizes = [2, 32], strides = [1, 1]} : vector<2x96xf32> to vector<2x32xf32>
    %126 = vector.broadcast %14 : vector<1x32xf32> to vector<2x32xf32>
    %127 = arith.addf %125, %126 : vector<2x32xf32>
    %128 = arith.mulf %115, %127 : vector<2x32xf32>
    %129 = arith.addf %124, %128 : vector<2x32xf32>
    %130 = math.tanh %129 : vector<2x32xf32>
    %cst_32 = arith.constant 1.000000e+00 : f32
    %131 = vector.broadcast %cst_32 : f32 to vector<2x32xf32>
    %132 = arith.subf %131, %123 : vector<2x32xf32>
    %133 = arith.mulf %132, %130 : vector<2x32xf32>
    %134 = arith.mulf %123, %105 : vector<2x32xf32>
    %135 = arith.addf %133, %134 : vector<2x32xf32>
    %136 = vector.extract_strided_slice %12 {offsets = [8, 0], sizes = [2, 96], strides = [1, 1]} : vector<16x96xf32> to vector<2x96xf32>
    %cst_33 = arith.constant dense<0.000000e+00> : vector<2x96xf32>
    %137 = tpu.matmul %135, %13, %cst_33 {dimension_numbers = #tpu.dot_dimension_numbers<[1], [0], [0], [1], [0, 0, 1, 1], [], []>} : vector<2x32xf32>, vector<32x96xf32>, vector<2x96xf32> -> vector<2x96xf32>
    %138 = vector.extract_strided_slice %136 {offsets = [0, 0], sizes = [2, 32], strides = [1, 1]} : vector<2x96xf32> to vector<2x32xf32>
    %139 = vector.extract_strided_slice %137 {offsets = [0, 0], sizes = [2, 32], strides = [1, 1]} : vector<2x96xf32> to vector<2x32xf32>
    %140 = arith.addf %138, %139 : vector<2x32xf32>
    %141 = arith.negf %140 : vector<2x32xf32>
    %142 = math.exp %141 : vector<2x32xf32>
    %cst_34 = arith.constant 1.000000e+00 : f32
    %143 = vector.broadcast %cst_34 : f32 to vector<2x32xf32>
    %144 = arith.addf %143, %142 : vector<2x32xf32>
    %145 = arith.divf %143, %144 : vector<2x32xf32>
    %146 = vector.extract_strided_slice %136 {offsets = [0, 32], sizes = [2, 32], strides = [1, 1]} : vector<2x96xf32> to vector<2x32xf32>
    %147 = vector.extract_strided_slice %137 {offsets = [0, 32], sizes = [2, 32], strides = [1, 1]} : vector<2x96xf32> to vector<2x32xf32>
    %148 = arith.addf %146, %147 : vector<2x32xf32>
    %149 = arith.negf %148 : vector<2x32xf32>
    %150 = math.exp %149 : vector<2x32xf32>
    %cst_35 = arith.constant 1.000000e+00 : f32
    %151 = vector.broadcast %cst_35 : f32 to vector<2x32xf32>
    %152 = arith.addf %151, %150 : vector<2x32xf32>
    %153 = arith.divf %151, %152 : vector<2x32xf32>
    %154 = vector.extract_strided_slice %136 {offsets = [0, 64], sizes = [2, 32], strides = [1, 1]} : vector<2x96xf32> to vector<2x32xf32>
    %155 = vector.extract_strided_slice %137 {offsets = [0, 64], sizes = [2, 32], strides = [1, 1]} : vector<2x96xf32> to vector<2x32xf32>
    %156 = vector.broadcast %14 : vector<1x32xf32> to vector<2x32xf32>
    %157 = arith.addf %155, %156 : vector<2x32xf32>
    %158 = arith.mulf %145, %157 : vector<2x32xf32>
    %159 = arith.addf %154, %158 : vector<2x32xf32>
    %160 = math.tanh %159 : vector<2x32xf32>
    %cst_36 = arith.constant 1.000000e+00 : f32
    %161 = vector.broadcast %cst_36 : f32 to vector<2x32xf32>
    %162 = arith.subf %161, %153 : vector<2x32xf32>
    %163 = arith.mulf %162, %160 : vector<2x32xf32>
    %164 = arith.mulf %153, %135 : vector<2x32xf32>
    %165 = arith.addf %163, %164 : vector<2x32xf32>
    %166 = vector.extract_strided_slice %12 {offsets = [10, 0], sizes = [2, 96], strides = [1, 1]} : vector<16x96xf32> to vector<2x96xf32>
    %cst_37 = arith.constant dense<0.000000e+00> : vector<2x96xf32>
    %167 = tpu.matmul %165, %13, %cst_37 {dimension_numbers = #tpu.dot_dimension_numbers<[1], [0], [0], [1], [0, 0, 1, 1], [], []>} : vector<2x32xf32>, vector<32x96xf32>, vector<2x96xf32> -> vector<2x96xf32>
    %168 = vector.extract_strided_slice %166 {offsets = [0, 0], sizes = [2, 32], strides = [1, 1]} : vector<2x96xf32> to vector<2x32xf32>
    %169 = vector.extract_strided_slice %167 {offsets = [0, 0], sizes = [2, 32], strides = [1, 1]} : vector<2x96xf32> to vector<2x32xf32>
    %170 = arith.addf %168, %169 : vector<2x32xf32>
    %171 = arith.negf %170 : vector<2x32xf32>
    %172 = math.exp %171 : vector<2x32xf32>
    %cst_38 = arith.constant 1.000000e+00 : f32
    %173 = vector.broadcast %cst_38 : f32 to vector<2x32xf32>
    %174 = arith.addf %173, %172 : vector<2x32xf32>
    %175 = arith.divf %173, %174 : vector<2x32xf32>
    %176 = vector.extract_strided_slice %166 {offsets = [0, 32], sizes = [2, 32], strides = [1, 1]} : vector<2x96xf32> to vector<2x32xf32>
    %177 = vector.extract_strided_slice %167 {offsets = [0, 32], sizes = [2, 32], strides = [1, 1]} : vector<2x96xf32> to vector<2x32xf32>
    %178 = arith.addf %176, %177 : vector<2x32xf32>
    %179 = arith.negf %178 : vector<2x32xf32>
    %180 = math.exp %179 : vector<2x32xf32>
    %cst_39 = arith.constant 1.000000e+00 : f32
    %181 = vector.broadcast %cst_39 : f32 to vector<2x32xf32>
    %182 = arith.addf %181, %180 : vector<2x32xf32>
    %183 = arith.divf %181, %182 : vector<2x32xf32>
    %184 = vector.extract_strided_slice %166 {offsets = [0, 64], sizes = [2, 32], strides = [1, 1]} : vector<2x96xf32> to vector<2x32xf32>
    %185 = vector.extract_strided_slice %167 {offsets = [0, 64], sizes = [2, 32], strides = [1, 1]} : vector<2x96xf32> to vector<2x32xf32>
    %186 = vector.broadcast %14 : vector<1x32xf32> to vector<2x32xf32>
    %187 = arith.addf %185, %186 : vector<2x32xf32>
    %188 = arith.mulf %175, %187 : vector<2x32xf32>
    %189 = arith.addf %184, %188 : vector<2x32xf32>
    %190 = math.tanh %189 : vector<2x32xf32>
    %cst_40 = arith.constant 1.000000e+00 : f32
    %191 = vector.broadcast %cst_40 : f32 to vector<2x32xf32>
    %192 = arith.subf %191, %183 : vector<2x32xf32>
    %193 = arith.mulf %192, %190 : vector<2x32xf32>
    %194 = arith.mulf %183, %165 : vector<2x32xf32>
    %195 = arith.addf %193, %194 : vector<2x32xf32>
    %196 = vector.extract_strided_slice %12 {offsets = [12, 0], sizes = [2, 96], strides = [1, 1]} : vector<16x96xf32> to vector<2x96xf32>
    %cst_41 = arith.constant dense<0.000000e+00> : vector<2x96xf32>
    %197 = tpu.matmul %195, %13, %cst_41 {dimension_numbers = #tpu.dot_dimension_numbers<[1], [0], [0], [1], [0, 0, 1, 1], [], []>} : vector<2x32xf32>, vector<32x96xf32>, vector<2x96xf32> -> vector<2x96xf32>
    %198 = vector.extract_strided_slice %196 {offsets = [0, 0], sizes = [2, 32], strides = [1, 1]} : vector<2x96xf32> to vector<2x32xf32>
    %199 = vector.extract_strided_slice %197 {offsets = [0, 0], sizes = [2, 32], strides = [1, 1]} : vector<2x96xf32> to vector<2x32xf32>
    %200 = arith.addf %198, %199 : vector<2x32xf32>
    %201 = arith.negf %200 : vector<2x32xf32>
    %202 = math.exp %201 : vector<2x32xf32>
    %cst_42 = arith.constant 1.000000e+00 : f32
    %203 = vector.broadcast %cst_42 : f32 to vector<2x32xf32>
    %204 = arith.addf %203, %202 : vector<2x32xf32>
    %205 = arith.divf %203, %204 : vector<2x32xf32>
    %206 = vector.extract_strided_slice %196 {offsets = [0, 32], sizes = [2, 32], strides = [1, 1]} : vector<2x96xf32> to vector<2x32xf32>
    %207 = vector.extract_strided_slice %197 {offsets = [0, 32], sizes = [2, 32], strides = [1, 1]} : vector<2x96xf32> to vector<2x32xf32>
    %208 = arith.addf %206, %207 : vector<2x32xf32>
    %209 = arith.negf %208 : vector<2x32xf32>
    %210 = math.exp %209 : vector<2x32xf32>
    %cst_43 = arith.constant 1.000000e+00 : f32
    %211 = vector.broadcast %cst_43 : f32 to vector<2x32xf32>
    %212 = arith.addf %211, %210 : vector<2x32xf32>
    %213 = arith.divf %211, %212 : vector<2x32xf32>
    %214 = vector.extract_strided_slice %196 {offsets = [0, 64], sizes = [2, 32], strides = [1, 1]} : vector<2x96xf32> to vector<2x32xf32>
    %215 = vector.extract_strided_slice %197 {offsets = [0, 64], sizes = [2, 32], strides = [1, 1]} : vector<2x96xf32> to vector<2x32xf32>
    %216 = vector.broadcast %14 : vector<1x32xf32> to vector<2x32xf32>
    %217 = arith.addf %215, %216 : vector<2x32xf32>
    %218 = arith.mulf %205, %217 : vector<2x32xf32>
    %219 = arith.addf %214, %218 : vector<2x32xf32>
    %220 = math.tanh %219 : vector<2x32xf32>
    %cst_44 = arith.constant 1.000000e+00 : f32
    %221 = vector.broadcast %cst_44 : f32 to vector<2x32xf32>
    %222 = arith.subf %221, %213 : vector<2x32xf32>
    %223 = arith.mulf %222, %220 : vector<2x32xf32>
    %224 = arith.mulf %213, %195 : vector<2x32xf32>
    %225 = arith.addf %223, %224 : vector<2x32xf32>
    %226 = vector.extract_strided_slice %12 {offsets = [14, 0], sizes = [2, 96], strides = [1, 1]} : vector<16x96xf32> to vector<2x96xf32>
    %cst_45 = arith.constant dense<0.000000e+00> : vector<2x96xf32>
    %227 = tpu.matmul %225, %13, %cst_45 {dimension_numbers = #tpu.dot_dimension_numbers<[1], [0], [0], [1], [0, 0, 1, 1], [], []>} : vector<2x32xf32>, vector<32x96xf32>, vector<2x96xf32> -> vector<2x96xf32>
    %228 = vector.extract_strided_slice %226 {offsets = [0, 0], sizes = [2, 32], strides = [1, 1]} : vector<2x96xf32> to vector<2x32xf32>
    %229 = vector.extract_strided_slice %227 {offsets = [0, 0], sizes = [2, 32], strides = [1, 1]} : vector<2x96xf32> to vector<2x32xf32>
    %230 = arith.addf %228, %229 : vector<2x32xf32>
    %231 = arith.negf %230 : vector<2x32xf32>
    %232 = math.exp %231 : vector<2x32xf32>
    %cst_46 = arith.constant 1.000000e+00 : f32
    %233 = vector.broadcast %cst_46 : f32 to vector<2x32xf32>
    %234 = arith.addf %233, %232 : vector<2x32xf32>
    %235 = arith.divf %233, %234 : vector<2x32xf32>
    %236 = vector.extract_strided_slice %226 {offsets = [0, 32], sizes = [2, 32], strides = [1, 1]} : vector<2x96xf32> to vector<2x32xf32>
    %237 = vector.extract_strided_slice %227 {offsets = [0, 32], sizes = [2, 32], strides = [1, 1]} : vector<2x96xf32> to vector<2x32xf32>
    %238 = arith.addf %236, %237 : vector<2x32xf32>
    %239 = arith.negf %238 : vector<2x32xf32>
    %240 = math.exp %239 : vector<2x32xf32>
    %cst_47 = arith.constant 1.000000e+00 : f32
    %241 = vector.broadcast %cst_47 : f32 to vector<2x32xf32>
    %242 = arith.addf %241, %240 : vector<2x32xf32>
    %243 = arith.divf %241, %242 : vector<2x32xf32>
    %244 = vector.extract_strided_slice %226 {offsets = [0, 64], sizes = [2, 32], strides = [1, 1]} : vector<2x96xf32> to vector<2x32xf32>
    %245 = vector.extract_strided_slice %227 {offsets = [0, 64], sizes = [2, 32], strides = [1, 1]} : vector<2x96xf32> to vector<2x32xf32>
    %246 = vector.broadcast %14 : vector<1x32xf32> to vector<2x32xf32>
    %247 = arith.addf %245, %246 : vector<2x32xf32>
    %248 = arith.mulf %235, %247 : vector<2x32xf32>
    %249 = arith.addf %244, %248 : vector<2x32xf32>
    %250 = math.tanh %249 : vector<2x32xf32>
    %cst_48 = arith.constant 1.000000e+00 : f32
    %251 = vector.broadcast %cst_48 : f32 to vector<2x32xf32>
    %252 = arith.subf %251, %243 : vector<2x32xf32>
    %253 = arith.mulf %252, %250 : vector<2x32xf32>
    %254 = arith.mulf %243, %225 : vector<2x32xf32>
    %255 = arith.addf %253, %254 : vector<2x32xf32>
    %256 = tpu.concatenate %45, %75, %105, %135, %165, %195, %225, %255 in 0 : vector<2x32xf32>, vector<2x32xf32>, vector<2x32xf32>, vector<2x32xf32>, vector<2x32xf32>, vector<2x32xf32>, vector<2x32xf32>, vector<2x32xf32> -> vector<16x32xf32>
    %c0_49 = arith.constant 0 : index
    %c0_50 = arith.constant 0 : index
    %257 = vector.load %arg10[%c0_49, %c0_50] : memref<16x32xf32, #tpu.memory_space<vmem>>, vector<16x32xf32>
    tpu.vector_store %arg10[%c0_49, %c0_50], %256 {strides = array<i32>} : memref<16x32xf32, #tpu.memory_space<vmem>>, vector<16x32xf32>,
    %c0_51 = arith.constant 0 : index
    %c0_52 = arith.constant 0 : index
    %258 = vector.load %arg8[%c0_51, %c0_52] : memref<32x9xf32, #tpu.memory_space<vmem>>, vector<32x9xf32>
    %cst_53 = arith.constant dense<0.000000e+00> : vector<16x9xf32>
    %259 = tpu.matmul %256, %258, %cst_53 {dimension_numbers = #tpu.dot_dimension_numbers<[1], [0], [0], [1], [0, 0, 1, 1], [], []>} : vector<16x32xf32>, vector<32x9xf32>, vector<16x9xf32> -> vector<16x9xf32>
    %c0_54 = arith.constant 0 : index
    %c0_55 = arith.constant 0 : index
    %260 = vector.load %arg9[%c0_54, %c0_55] : memref<1x9xf32, #tpu.memory_space<vmem>>, vector<1x9xf32>
    %261 = vector.broadcast %260 : vector<1x9xf32> to vector<16x9xf32>
    %262 = arith.addf %259, %261 : vector<16x9xf32>
    %c0_56 = arith.constant 0 : index
    %c0_57 = arith.constant 0 : index
    %263 = vector.load %arg11[%c0_56, %c0_57] : memref<16x9xf32, #tpu.memory_space<vmem>>, vector<16x9xf32>
    tpu.vector_store %arg11[%c0_56, %c0_57], %262 {strides = array<i32>} : memref<16x9xf32, #tpu.memory_space<vmem>>, vector<16x9xf32>,
    return
  }
}

</mosaic_0001>

<llo_original>
// kernel: rnn_forward.1
$region0: #{rnn_forward.1}
  #allocation0 [shape = 'u32[]', space=smem, size = 0x4, offset = 0x4, fixed_abs, tag = 'smem constant byte address 0x4 - core index']
  #allocation1 [shape = 'u32[144,128]{1,0:T(1,128)}', space=vmem, size = 0x12000, scoped, tag = 'internal scratch']
  %s0 = inlined_call_operand.vmem [shape: f32[16,16], index: 0, kind: input, shape index: {}]
  %s1 = inlined_call_operand.vmem [shape: f32[2,32], index: 1, kind: input, shape index: {}]
  %s2 = inlined_call_operand.vmem [shape: f32[16,32], index: 2, kind: input, shape index: {}]
  %s3 = inlined_call_operand.vmem [shape: f32[1,32], index: 3, kind: input, shape index: {}]
  %s4 = inlined_call_operand.vmem [shape: f32[32,96], index: 4, kind: input, shape index: {}]
  %s5 = inlined_call_operand.vmem [shape: f32[1,96], index: 5, kind: input, shape index: {}]
  %s6 = inlined_call_operand.vmem [shape: f32[32,96], index: 6, kind: input, shape index: {}]
  %s7 = inlined_call_operand.vmem [shape: f32[1,32], index: 7, kind: input, shape index: {}]
  %s8 = inlined_call_operand.vmem [shape: f32[32,9], index: 8, kind: input, shape index: {}]
  %s9 = inlined_call_operand.vmem [shape: f32[1,9], index: 9, kind: input, shape index: {}]
  %s10 = inlined_call_operand.vmem [shape: f32[16,32], index: 10, kind: output, shape index: {0}]
  %s11 = inlined_call_operand.vmem [shape: f32[16,9], index: 11, kind: output, shape index: {1}]
  %12 = xla_tuple %s10, %s11
  %s13 = sld [smem:[#allocation0]]
  $region58: #{rnn_forward.1} parent=0
    _
  %s15 = ssub.s32 1, %s13
  %s16 = scalar_select 0, %s15, %s13
  // Predicated region
  $region2: #{rnn_forward.1} parent=0 // pred_check
    _
  $region3: #{rnn_forward.1} parent=0 // pred_check_branch
    %18 = sbr.rel (0) target = $region5
  $region4: #{rnn_forward.1} parent=0 // pred_region
    _
  $region5: #{rnn_forward.1} parent=0 // pred_fallthru
    _
  // Predicated region
  $region6: #{rnn_forward.1} parent=0 // pred_check
    _
  $region7: #{rnn_forward.1} parent=0 // pred_check_branch
    %20 = sbr.rel (0) target = $region9
  $region8: #{rnn_forward.1} parent=0 // pred_region
    _
  $region9: #{rnn_forward.1} parent=0 // pred_fallthru
    _
  // Predicated region
  $region10: #{rnn_forward.1} parent=0 // pred_check
    _
  $region11: #{rnn_forward.1} parent=0 // pred_check_branch
    %22 = sbr.rel (0) target = $region13
  $region12: #{rnn_forward.1} parent=0 // pred_region
    _
  $region13: #{rnn_forward.1} parent=0 // pred_fallthru
    _
  // Predicated region
  $region14: #{rnn_forward.1} parent=0 // pred_check
    _
  $region15: #{rnn_forward.1} parent=0 // pred_check_branch
    %24 = sbr.rel (0) target = $region17
  $region16: #{rnn_forward.1} parent=0 // pred_region
    _
  $region17: #{rnn_forward.1} parent=0 // pred_fallthru
    _
  // Predicated region
  $region18: #{rnn_forward.1} parent=0 // pred_check
    _
  $region19: #{rnn_forward.1} parent=0 // pred_check_branch
    %26 = sbr.rel (0) target = $region21
  $region20: #{rnn_forward.1} parent=0 // pred_region
    _
  $region21: #{rnn_forward.1} parent=0 // pred_fallthru
    _
  // Predicated region
  $region22: #{rnn_forward.1} parent=0 // pred_check
    _
  $region23: #{rnn_forward.1} parent=0 // pred_check_branch
    %28 = sbr.rel (0) target = $region25
  $region24: #{rnn_forward.1} parent=0 // pred_region
    _
  $region25: #{rnn_forward.1} parent=0 // pred_fallthru
    _
  // Predicated region
  $region26: #{rnn_forward.1} parent=0 // pred_check
    _
  $region27: #{rnn_forward.1} parent=0 // pred_check_branch
    %30 = sbr.rel (0) target = $region29
  $region28: #{rnn_forward.1} parent=0 // pred_region
    _
  $region29: #{rnn_forward.1} parent=0 // pred_fallthru
    _
  // Predicated region
  $region30: #{rnn_forward.1} parent=0 // pred_check
    _
  $region31: #{rnn_forward.1} parent=0 // pred_check_branch
    %32 = sbr.rel (0) target = $region33
  $region32: #{rnn_forward.1} parent=0 // pred_region
    _
  $region33: #{rnn_forward.1} parent=0 // pred_fallthru
    _
  // Predicated region
  $region34: #{rnn_forward.1} parent=0 // pred_check
    _
  $region35: #{rnn_forward.1} parent=0 // pred_check_branch
    %34 = sbr.rel (0) target = $region37
  $region36: #{rnn_forward.1} parent=0 // pred_region
    _
  $region37: #{rnn_forward.1} parent=0 // pred_fallthru
    _
  // Predicated region
  $region38: #{rnn_forward.1} parent=0 // pred_check
    _
  $region39: #{rnn_forward.1} parent=0 // pred_check_branch
    %36 = sbr.rel (0) target = $region41
  $region40: #{rnn_forward.1} parent=0 // pred_region
    _
  $region41: #{rnn_forward.1} parent=0 // pred_fallthru
    _
  %v37 = vld [vmem:[%s0] sm:$0xff]
  %v38 = vld [vmem:[%s0 + $0x8] sm:$0xff]
  %v39 = vld [vmem:[%s2] sm:$0xff]
  %v40 = vld [vmem:[%s2 + $0x8] sm:$0xff]
  %v41 = vld [vmem:[%s3] sm:$0x1]
  %v43 = vlaneseq
  %v44 = vshrl.u32 %v43, 7
  %v45 = vsub.s32 0, %v44
  %v46 = vrot.slane %v41, %v45
  %vm48 = vcmask 130048
  %v50 = vsel %vm48, %v37, 0
  %v53 = vsel %vm48, %v38, 0
  %55 = vmatprep.subr.mxu0 0.0
  %56 = vmatpush1.msra.mxu0 0.0
  %57 = vmatprep.subr.mxu0 0.0
  %58 = vmatpush1.msra.mxu0 0.0
  %59 = vmatprep.subr.mxu0 0.0
  %60 = vmatpush1.msra.mxu0 0.0
  %61 = vmatprep.subr.mxu0 0.0
  %62 = vmatpush1.msra.mxu0 0.0
  %63 = vmatprep.subr.mxu0 0.0
  %64 = vmatpush1.msra.mxu0 0.0
  %65 = vmatprep.subr.mxu0 0.0
  %66 = vmatpush1.msra.mxu0 0.0
  %67 = vmatprep.subr.mxu0 0.0
  %68 = vmatpush1.msra.mxu0 0.0
  %69 = vmatprep.subr.mxu0 0.0
  %70 = vmatpush1.msra.mxu0 0.0
  %71 = vmatprep.subr.mxu0 0.0
  %72 = vmatpush1.msra.mxu0 0.0
  %73 = vmatprep.subr.mxu0 0.0
  %74 = vmatpush1.msra.mxu0 0.0
  %75 = vmatprep.subr.mxu0 0.0
  %76 = vmatpush1.msra.mxu0 0.0
  %77 = vmatprep.subr.mxu0 0.0
  %78 = vmatpush1.msra.mxu0 0.0
  %79 = vmatprep.subr.mxu0 0.0
  %80 = vmatpush1.msra.mxu0 0.0
  %81 = vmatprep.subr.mxu0 0.0
  %82 = vmatpush1.msra.mxu0 0.0
  %83 = vmatprep.subr.mxu0 0.0
  %84 = vmatpush1.msra.mxu0 %v40
  %85 = vmatprep.subr.mxu0 0.0
  %86 = vmatpush1.msra.mxu0 %v39
  %87 = vmatprep.subr.mxu0 0.0
  %88 = vmatpush2.msra.mxu0 0.0
  %89 = vmatprep.subr.mxu0 0.0
  %90 = vmatpush2.msra.mxu0 0.0
  %91 = vmatprep.subr.mxu0 0.0
  %92 = vmatpush2.msra.mxu0 0.0
  %93 = vmatprep.subr.mxu0 0.0
  %94 = vmatpush2.msra.mxu0 0.0
  %95 = vmatprep.subr.mxu0 0.0
  %96 = vmatpush2.msra.mxu0 0.0
  %97 = vmatprep.subr.mxu0 0.0
  %98 = vmatpush2.msra.mxu0 0.0
  %99 = vmatprep.subr.mxu0 0.0
  %100 = vmatpush2.msra.mxu0 0.0
  %101 = vmatprep.subr.mxu0 0.0
  %102 = vmatpush2.msra.mxu0 0.0
  %103 = vmatprep.subr.mxu0 0.0
  %104 = vmatpush2.msra.mxu0 0.0
  %105 = vmatprep.subr.mxu0 0.0
  %106 = vmatpush2.msra.mxu0 0.0
  %107 = vmatprep.subr.mxu0 0.0
  %108 = vmatpush2.msra.mxu0 0.0
  %109 = vmatprep.subr.mxu0 0.0
  %110 = vmatpush2.msra.mxu0 0.0
  %111 = vmatprep.subr.mxu0 0.0
  %112 = vmatpush2.msra.mxu0 0.0
  %113 = vmatprep.subr.mxu0 0.0
  %114 = vmatpush2.msra.mxu0 0.0
  %115 = vmatprep.subr.mxu0 0.0
  %116 = vmatpush2.msra.mxu0 0.0
  %117 = vmatprep.subr.mxu0 0.0
  %118 = vmatpush2.msra.mxu0 0.0
  %119 = vmatprep.mubr.f32.mxu0 0.0
  %120 = vmatmul.mubr.f32.gmra.mxu0 %v50
  %v121 = vpop.f32.mrf.mxu0
  %v122 = vadd.f32 %v46, %v121
  %v123 = vpop.f32.mrf.mxu0
  %124 = vmatprep.mubr.f32.mxu0 0.0
  %125 = vmatmul.mubr.f32.gmra.mxu0 %v53
  %v126 = vpop.f32.mrf.mxu0
  %v127 = vadd.f32 %v46, %v126
  %v128 = vpop.f32.mrf.mxu0
  %129 = vdwg.mxu0
  %v130 = vmax.f32 %v122, 0.0
  %v131 = vmax.f32 %v127, 0.0
  %v132 = vld [vmem:[%s4] sm:$0xff]
  %v133 = vld [vmem:[%s4 + $0x8] sm:$0xff]
  %v134 = vld [vmem:[%s4 + $0x10] sm:$0xff]
  %v135 = vld [vmem:[%s4 + $0x18] sm:$0xff]
  %v136 = vld [vmem:[%s5] sm:$0x1]
  %v138 = vlaneseq
  %v139 = vshrl.u32 %v138, 7
  %v140 = vsub.s32 0, %v139
  %v141 = vrot.slane %v136, %v140
  %vm143 = vcmask 261120
  %v145 = vsel %vm143, %v130, 0
  %v148 = vsel %vm143, %v131, 0
  %150 = vmatprep.subr.mxu0 0.0
  %151 = vmatpush1.msra.mxu0 0.0
  %152 = vmatprep.subr.mxu0 0.0
  %153 = vmatpush1.msra.mxu0 0.0
  %154 = vmatprep.subr.mxu0 0.0
  %155 = vmatpush1.msra.mxu0 0.0
  %156 = vmatprep.subr.mxu0 0.0
  %157 = vmatpush1.msra.mxu0 0.0
  %158 = vmatprep.subr.mxu0 0.0
  %159 = vmatpush1.msra.mxu0 0.0
  %160 = vmatprep.subr.mxu0 0.0
  %161 = vmatpush1.msra.mxu0 0.0
  %162 = vmatprep.subr.mxu0 0.0
  %163 = vmatpush1.msra.mxu0 0.0
  %164 = vmatprep.subr.mxu0 0.0
  %165 = vmatpush1.msra.mxu0 0.0
  %166 = vmatprep.subr.mxu0 0.0
  %167 = vmatpush1.msra.mxu0 0.0
  %168 = vmatprep.subr.mxu0 0.0
  %169 = vmatpush1.msra.mxu0 0.0
  %170 = vmatprep.subr.mxu0 0.0
  %171 = vmatpush1.msra.mxu0 0.0
  %172 = vmatprep.subr.mxu0 0.0
  %173 = vmatpush1.msra.mxu0 0.0
  %174 = vmatprep.subr.mxu0 0.0
  %175 = vmatpush1.msra.mxu0 %v135
  %176 = vmatprep.subr.mxu0 0.0
  %177 = vmatpush1.msra.mxu0 %v134
  %178 = vmatprep.subr.mxu0 0.0
  %179 = vmatpush1.msra.mxu0 %v133
  %180 = vmatprep.subr.mxu0 0.0
  %181 = vmatpush1.msra.mxu0 %v132
  %182 = vmatprep.subr.mxu0 0.0
  %183 = vmatpush2.msra.mxu0 0.0
  %184 = vmatprep.subr.mxu0 0.0
  %185 = vmatpush2.msra.mxu0 0.0
  %186 = vmatprep.subr.mxu0 0.0
  %187 = vmatpush2.msra.mxu0 0.0
  %188 = vmatprep.subr.mxu0 0.0
  %189 = vmatpush2.msra.mxu0 0.0
  %190 = vmatprep.subr.mxu0 0.0
  %191 = vmatpush2.msra.mxu0 0.0
  %192 = vmatprep.subr.mxu0 0.0
  %193 = vmatpush2.msra.mxu0 0.0
  %194 = vmatprep.subr.mxu0 0.0
  %195 = vmatpush2.msra.mxu0 0.0
  %196 = vmatprep.subr.mxu0 0.0
  %197 = vmatpush2.msra.mxu0 0.0
  %198 = vmatprep.subr.mxu0 0.0
  %199 = vmatpush2.msra.mxu0 0.0
  %200 = vmatprep.subr.mxu0 0.0
  %201 = vmatpush2.msra.mxu0 0.0
  %202 = vmatprep.subr.mxu0 0.0
  %203 = vmatpush2.msra.mxu0 0.0
  %204 = vmatprep.subr.mxu0 0.0
  %205 = vmatpush2.msra.mxu0 0.0
  %206 = vmatprep.subr.mxu0 0.0
  %207 = vmatpush2.msra.mxu0 0.0
  %208 = vmatprep.subr.mxu0 0.0
  %209 = vmatpush2.msra.mxu0 0.0
  %210 = vmatprep.subr.mxu0 0.0
  %211 = vmatpush2.msra.mxu0 0.0
  %212 = vmatprep.subr.mxu0 0.0
  %213 = vmatpush2.msra.mxu0 0.0
  %214 = vmatprep.mubr.f32.mxu0 0.0
  %215 = vmatmul.mubr.f32.gmra.mxu0 %v145
  %v216 = vpop.f32.mrf.mxu0
  %v217 = vadd.f32 %v141, %v216
  %v218 = vpop.f32.mrf.mxu0
  %219 = vmatprep.mubr.f32.mxu0 0.0
  %220 = vmatmul.mubr.f32.gmra.mxu0 %v148
  %v221 = vpop.f32.mrf.mxu0
  %v222 = vadd.f32 %v141, %v221
  %v223 = vpop.f32.mrf.mxu0
  %224 = vdwg.mxu0
  %v225 = vld [vmem:[%s6] sm:$0xff]
  %v226 = vld [vmem:[%s6 + $0x8] sm:$0xff]
  %v227 = vld [vmem:[%s6 + $0x10] sm:$0xff]
  %v228 = vld [vmem:[%s6 + $0x18] sm:$0xff]
  %v229 = vld [vmem:[%s7] sm:$0x1]
  %v230 = vld [vmem:[%s1] sm:$0x3]
  %v232 = vsel %vm143, %v230, 0
  %234 = vmatprep.subr.mxu0 0.0
  %235 = vmatpush1.msra.mxu0 0.0
  %236 = vmatprep.subr.mxu0 0.0
  %237 = vmatpush1.msra.mxu0 0.0
  %238 = vmatprep.subr.mxu0 0.0
  %239 = vmatpush1.msra.mxu0 0.0
  %240 = vmatprep.subr.mxu0 0.0
  %241 = vmatpush1.msra.mxu0 0.0
  %242 = vmatprep.subr.mxu0 0.0
  %243 = vmatpush1.msra.mxu0 0.0
  %244 = vmatprep.subr.mxu0 0.0
  %245 = vmatpush1.msra.mxu0 0.0
  %246 = vmatprep.subr.mxu0 0.0
  %247 = vmatpush1.msra.mxu0 0.0
  %248 = vmatprep.subr.mxu0 0.0
  %249 = vmatpush1.msra.mxu0 0.0
  %250 = vmatprep.subr.mxu0 0.0
  %251 = vmatpush1.msra.mxu0 0.0
  %252 = vmatprep.subr.mxu0 0.0
  %253 = vmatpush1.msra.mxu0 0.0
  %254 = vmatprep.subr.mxu0 0.0
  %255 = vmatpush1.msra.mxu0 0.0
  %256 = vmatprep.subr.mxu0 0.0
  %257 = vmatpush1.msra.mxu0 0.0
  %258 = vmatprep.subr.mxu0 0.0
  %259 = vmatpush1.msra.mxu0 %v228
  %260 = vmatprep.subr.mxu0 0.0
  %261 = vmatpush1.msra.mxu0 %v227
  %262 = vmatprep.subr.mxu0 0.0
  %263 = vmatpush1.msra.mxu0 %v226
  %264 = vmatprep.subr.mxu0 0.0
  %265 = vmatpush1.msra.mxu0 %v225
  %266 = vmatprep.subr.mxu0 0.0
  %267 = vmatpush2.msra.mxu0 0.0
  %268 = vmatprep.subr.mxu0 0.0
  %269 = vmatpush2.msra.mxu0 0.0
  %270 = vmatprep.subr.mxu0 0.0
  %271 = vmatpush2.msra.mxu0 0.0
  %272 = vmatprep.subr.mxu0 0.0
  %273 = vmatpush2.msra.mxu0 0.0
  %274 = vmatprep.subr.mxu0 0.0
  %275 = vmatpush2.msra.mxu0 0.0
  %276 = vmatprep.subr.mxu0 0.0
  %277 = vmatpush2.msra.mxu0 0.0
  %278 = vmatprep.subr.mxu0 0.0
  %279 = vmatpush2.msra.mxu0 0.0
  %280 = vmatprep.subr.mxu0 0.0
  %281 = vmatpush2.msra.mxu0 0.0
  %282 = vmatprep.subr.mxu0 0.0
  %283 = vmatpush2.msra.mxu0 0.0
  %284 = vmatprep.subr.mxu0 0.0
  %285 = vmatpush2.msra.mxu0 0.0
  %286 = vmatprep.subr.mxu0 0.0
  %287 = vmatpush2.msra.mxu0 0.0
  %288 = vmatprep.subr.mxu0 0.0
  %289 = vmatpush2.msra.mxu0 0.0
  %290 = vmatprep.subr.mxu0 0.0
  %291 = vmatpush2.msra.mxu0 0.0
  %292 = vmatprep.subr.mxu0 0.0
  %293 = vmatpush2.msra.mxu0 0.0
  %294 = vmatprep.subr.mxu0 0.0
  %295 = vmatpush2.msra.mxu0 0.0
  %296 = vmatprep.subr.mxu0 0.0
  %297 = vmatpush2.msra.mxu0 0.0
  %298 = vmatprep.mubr.f32.mxu0 0.0
  %299 = vmatmul.mubr.f32.gmra.mxu0 %v232
  %v300 = vpop.f32.mrf.mxu0
  %v301 = vadd.f32 0.0, %v300
  %v302 = vpop.f32.mrf.mxu0
  %303 = vdwg.mxu0
  %v304 = vadd.f32 %v217, %v301
  %v305 = vxor.u32 %v304, 2147483648
  %v306 = vmul.f32 %v305, 1.442695
  %v307 = vpow.pop %v306
  %v308 = vadd.f32 %v307, 1.0
  %v309 = vrcp.pop %v308
  %v310 = vmul.f32 1.0, %v309
  %v312 = vlaneseq
  %v313 = vshrl.u32 %v312, 7
  %v314 = vsub.s32 0, %v313
  %v315 = vrot.slane %v229, %v314
  %316 = vrot.lane.b32.xlu0 %v315, 64
  %v317 = vpop.permute.xlu0 %316
  %v319 = vadd.f32 %v301, %v317
  %321 = vrot.lane.b32.xlu0 %v319, 64
  %v322 = vpop.permute.xlu0 %321
  %v324 = vmul.f32 %v310, %v322
  %326 = vrot.lane.b32.xlu0 %v324, 64
  %v327 = vpop.permute.xlu0 %326
  %v329 = vadd.f32 %v217, %v327
  %v330 = vtanh.pop %v329
  %v331 = vsub.f32 1.0, %v310
  %333 = vrot.lane.b32.xlu0 %v330, 96
  %v334 = vpop.permute.xlu0 %333
  %v336 = vmul.f32 %v331, %v334
  %337 = vrot.lane.b32.xlu0 %v230, 32
  %v338 = vpop.permute.xlu0 %337
  %v340 = vmul.f32 %v310, %v338
  %v341 = vadd.f32 %v336, %v340
  %343 = vrot.lane.b32.xlu0 %v341, 96
  %v344 = vpop.permute.xlu0 %343
  %v345 = vsel %vm143, %v344, 0
  %347 = vmatprep.subr.mxu0 0.0
  %348 = vmatpush1.msra.mxu0 0.0
  %349 = vmatprep.subr.mxu0 0.0
  %350 = vmatpush1.msra.mxu0 0.0
  %351 = vmatprep.subr.mxu0 0.0
  %352 = vmatpush1.msra.mxu0 0.0
  %353 = vmatprep.subr.mxu0 0.0
  %354 = vmatpush1.msra.mxu0 0.0
  %355 = vmatprep.subr.mxu0 0.0
  %356 = vmatpush1.msra.mxu0 0.0
  %357 = vmatprep.subr.mxu0 0.0
  %358 = vmatpush1.msra.mxu0 0.0
  %359 = vmatprep.subr.mxu0 0.0
  %360 = vmatpush1.msra.mxu0 0.0
  %361 = vmatprep.subr.mxu0 0.0
  %362 = vmatpush1.msra.mxu0 0.0
  %363 = vmatprep.subr.mxu0 0.0
  %364 = vmatpush1.msra.mxu0 0.0
  %365 = vmatprep.subr.mxu0 0.0
  %366 = vmatpush1.msra.mxu0 0.0
  %367 = vmatprep.subr.mxu0 0.0
  %368 = vmatpush1.msra.mxu0 0.0
  %369 = vmatprep.subr.mxu0 0.0
  %370 = vmatpush1.msra.mxu0 0.0
  %371 = vmatprep.subr.mxu0 0.0
  %372 = vmatpush1.msra.mxu0 %v228
  %373 = vmatprep.subr.mxu0 0.0
  %374 = vmatpush1.msra.mxu0 %v227
  %375 = vmatprep.subr.mxu0 0.0
  %376 = vmatpush1.msra.mxu0 %v226
  %377 = vmatprep.subr.mxu0 0.0
  %378 = vmatpush1.msra.mxu0 %v225
  %379 = vmatprep.subr.mxu0 0.0
  %380 = vmatpush2.msra.mxu0 0.0
  %381 = vmatprep.subr.mxu0 0.0
  %382 = vmatpush2.msra.mxu0 0.0
  %383 = vmatprep.subr.mxu0 0.0
  %384 = vmatpush2.msra.mxu0 0.0
  %385 = vmatprep.subr.mxu0 0.0
  %386 = vmatpush2.msra.mxu0 0.0
  %387 = vmatprep.subr.mxu0 0.0
  %388 = vmatpush2.msra.mxu0 0.0
  %389 = vmatprep.subr.mxu0 0.0
  %390 = vmatpush2.msra.mxu0 0.0
  %391 = vmatprep.subr.mxu0 0.0
  %392 = vmatpush2.msra.mxu0 0.0
  %393 = vmatprep.subr.mxu0 0.0
  %394 = vmatpush2.msra.mxu0 0.0
  %395 = vmatprep.subr.mxu0 0.0
  %396 = vmatpush2.msra.mxu0 0.0
  %397 = vmatprep.subr.mxu0 0.0
  %398 = vmatpush2.msra.mxu0 0.0
  %399 = vmatprep.subr.mxu0 0.0
  %400 = vmatpush2.msra.mxu0 0.0
  %401 = vmatprep.subr.mxu0 0.0
  %402 = vmatpush2.msra.mxu0 0.0
  %403 = vmatprep.subr.mxu0 0.0
  %404 = vmatpush2.msra.mxu0 0.0
  %405 = vmatprep.subr.mxu0 0.0
  %406 = vmatpush2.msra.mxu0 0.0
  %407 = vmatprep.subr.mxu0 0.0
  %408 = vmatpush2.msra.mxu0 0.0
  %409 = vmatprep.subr.mxu0 0.0
  %410 = vmatpush2.msra.mxu0 0.0
  %411 = vmatprep.mubr.f32.mxu0 0.0
  %412 = vmatmul.mubr.f32.gmra.mxu0 %v345
  %v413 = vpop.f32.mrf.mxu0
  %v414 = vadd.f32 0.0, %v413
  %v415 = vpop.f32.mrf.mxu0
  %416 = vdwg.mxu0
  %v418 = vrot.slane %v414, 6
  %v420 = vadd.f32 %v217, %v418
  %v421 = vxor.u32 %v420, 2147483648
  %v422 = vmul.f32 %v421, 1.442695
  %v423 = vpow.pop %v422
  %v424 = vadd.f32 %v423, 1.0
  %v425 = vrcp.pop %v424
  %v426 = vmul.f32 1.0, %v425
  %v427 = vadd.f32 %v414, %v317
  %v429 = vrot.slane %v427, 6
  %430 = vrot.lane.b32.xlu0 %v429, 64
  %v431 = vpop.permute.xlu0 %430
  %v433 = vmul.f32 %v426, %v431
  %435 = vrot.lane.b32.xlu0 %v433, 64
  %v436 = vpop.permute.xlu0 %435
  %v438 = vadd.f32 %v217, %v436
  %v439 = vtanh.pop %v438
  %v440 = vsub.f32 1.0, %v426
  %442 = vrot.lane.b32.xlu0 %v439, 96
  %v443 = vpop.permute.xlu0 %442
  %v445 = vmul.f32 %v440, %v443
  %v446 = vrot.slane %v341, 6
  %v448 = vmul.f32 %v426, %v446
  %v449 = vadd.f32 %v445, %v448
  %v451 = vrot.slane %v449, 2
  %452 = vrot.lane.b32.xlu0 %v451, 96
  %v453 = vpop.permute.xlu0 %452
  %v454 = vsel %vm143, %v453, 0
  %456 = vmatprep.subr.mxu0 0.0
  %457 = vmatpush1.msra.mxu0 0.0
  %458 = vmatprep.subr.mxu0 0.0
  %459 = vmatpush1.msra.mxu0 0.0
  %460 = vmatprep.subr.mxu0 0.0
  %461 = vmatpush1.msra.mxu0 0.0
  %462 = vmatprep.subr.mxu0 0.0
  %463 = vmatpush1.msra.mxu0 0.0
  %464 = vmatprep.subr.mxu0 0.0
  %465 = vmatpush1.msra.mxu0 0.0
  %466 = vmatprep.subr.mxu0 0.0
  %467 = vmatpush1.msra.mxu0 0.0
  %468 = vmatprep.subr.mxu0 0.0
  %469 = vmatpush1.msra.mxu0 0.0
  %470 = vmatprep.subr.mxu0 0.0
  %471 = vmatpush1.msra.mxu0 0.0
  %472 = vmatprep.subr.mxu0 0.0
  %473 = vmatpush1.msra.mxu0 0.0
  %474 = vmatprep.subr.mxu0 0.0
  %475 = vmatpush1.msra.mxu0 0.0
  %476 = vmatprep.subr.mxu0 0.0
  %477 = vmatpush1.msra.mxu0 0.0
  %478 = vmatprep.subr.mxu0 0.0
  %479 = vmatpush1.msra.mxu0 0.0
  %480 = vmatprep.subr.mxu0 0.0
  %481 = vmatpush1.msra.mxu0 %v228
  %482 = vmatprep.subr.mxu0 0.0
  %483 = vmatpush1.msra.mxu0 %v227
  %484 = vmatprep.subr.mxu0 0.0
  %485 = vmatpush1.msra.mxu0 %v226
  %486 = vmatprep.subr.mxu0 0.0
  %487 = vmatpush1.msra.mxu0 %v225
  %488 = vmatprep.subr.mxu0 0.0
  %489 = vmatpush2.msra.mxu0 0.0
  %490 = vmatprep.subr.mxu0 0.0
  %491 = vmatpush2.msra.mxu0 0.0
  %492 = vmatprep.subr.mxu0 0.0
  %493 = vmatpush2.msra.mxu0 0.0
  %494 = vmatprep.subr.mxu0 0.0
  %495 = vmatpush2.msra.mxu0 0.0
  %496 = vmatprep.subr.mxu0 0.0
  %497 = vmatpush2.msra.mxu0 0.0
  %498 = vmatprep.subr.mxu0 0.0
  %499 = vmatpush2.msra.mxu0 0.0
  %500 = vmatprep.subr.mxu0 0.0
  %501 = vmatpush2.msra.mxu0 0.0
  %502 = vmatprep.subr.mxu0 0.0
  %503 = vmatpush2.msra.mxu0 0.0
  %504 = vmatprep.subr.mxu0 0.0
  %505 = vmatpush2.msra.mxu0 0.0
  %506 = vmatprep.subr.mxu0 0.0
  %507 = vmatpush2.msra.mxu0 0.0
  %508 = vmatprep.subr.mxu0 0.0
  %509 = vmatpush2.msra.mxu0 0.0
  %510 = vmatprep.subr.mxu0 0.0
  %511 = vmatpush2.msra.mxu0 0.0
  %512 = vmatprep.subr.mxu0 0.0
  %513 = vmatpush2.msra.mxu0 0.0
  %514 = vmatprep.subr.mxu0 0.0
  %515 = vmatpush2.msra.mxu0 0.0
  %516 = vmatprep.subr.mxu0 0.0
  %517 = vmatpush2.msra.mxu0 0.0
  %518 = vmatprep.subr.mxu0 0.0
  %519 = vmatpush2.msra.mxu0 0.0
  %520 = vmatprep.mubr.f32.mxu0 0.0
  %521 = vmatmul.mubr.f32.gmra.mxu0 %v454
  %v522 = vpop.f32.mrf.mxu0
  %v523 = vadd.f32 0.0, %v522
  %v524 = vpop.f32.mrf.mxu0
  %525 = vdwg.mxu0
  %v527 = vrot.slane %v523, 4
  %v529 = vadd.f32 %v217, %v527
  %v530 = vxor.u32 %v529, 2147483648
  %v531 = vmul.f32 %v530, 1.442695
  %v532 = vpow.pop %v531
  %v533 = vadd.f32 %v532, 1.0
  %v534 = vrcp.pop %v533
  %v535 = vmul.f32 1.0, %v534
  %v536 = vadd.f32 %v523, %v317
  %v538 = vrot.slane %v536, 4
  %539 = vrot.lane.b32.xlu0 %v538, 64
  %v540 = vpop.permute.xlu0 %539
  %v542 = vmul.f32 %v535, %v540
  %544 = vrot.lane.b32.xlu0 %v542, 64
  %v545 = vpop.permute.xlu0 %544
  %v547 = vadd.f32 %v217, %v545
  %v548 = vtanh.pop %v547
  %v549 = vsub.f32 1.0, %v535
  %551 = vrot.lane.b32.xlu0 %v548, 96
  %v552 = vpop.permute.xlu0 %551
  %v554 = vmul.f32 %v549, %v552
  %v555 = vrot.slane %v449, 6
  %v557 = vmul.f32 %v535, %v555
  %v558 = vadd.f32 %v554, %v557
  %v560 = vrot.slane %v558, 4
  %561 = vrot.lane.b32.xlu0 %v560, 96
  %v562 = vpop.permute.xlu0 %561
  %v563 = vsel %vm143, %v562, 0
  %565 = vmatprep.subr.mxu0 0.0
  %566 = vmatpush1.msra.mxu0 0.0
  %567 = vmatprep.subr.mxu0 0.0
  %568 = vmatpush1.msra.mxu0 0.0
  %569 = vmatprep.subr.mxu0 0.0
  %570 = vmatpush1.msra.mxu0 0.0
  %571 = vmatprep.subr.mxu0 0.0
  %572 = vmatpush1.msra.mxu0 0.0
  %573 = vmatprep.subr.mxu0 0.0
  %574 = vmatpush1.msra.mxu0 0.0
  %575 = vmatprep.subr.mxu0 0.0
  %576 = vmatpush1.msra.mxu0 0.0
  %577 = vmatprep.subr.mxu0 0.0
  %578 = vmatpush1.msra.mxu0 0.0
  %579 = vmatprep.subr.mxu0 0.0
  %580 = vmatpush1.msra.mxu0 0.0
  %581 = vmatprep.subr.mxu0 0.0
  %582 = vmatpush1.msra.mxu0 0.0
  %583 = vmatprep.subr.mxu0 0.0
  %584 = vmatpush1.msra.mxu0 0.0
  %585 = vmatprep.subr.mxu0 0.0
  %586 = vmatpush1.msra.mxu0 0.0
  %587 = vmatprep.subr.mxu0 0.0
  %588 = vmatpush1.msra.mxu0 0.0
  %589 = vmatprep.subr.mxu0 0.0
  %590 = vmatpush1.msra.mxu0 %v228
  %591 = vmatprep.subr.mxu0 0.0
  %592 = vmatpush1.msra.mxu0 %v227
  %593 = vmatprep.subr.mxu0 0.0
  %594 = vmatpush1.msra.mxu0 %v226
  %595 = vmatprep.subr.mxu0 0.0
  %596 = vmatpush1.msra.mxu0 %v225
  %597 = vmatprep.subr.mxu0 0.0
  %598 = vmatpush2.msra.mxu0 0.0
  %599 = vmatprep.subr.mxu0 0.0
  %600 = vmatpush2.msra.mxu0 0.0
  %601 = vmatprep.subr.mxu0 0.0
  %602 = vmatpush2.msra.mxu0 0.0
  %603 = vmatprep.subr.mxu0 0.0
  %604 = vmatpush2.msra.mxu0 0.0
  %605 = vmatprep.subr.mxu0 0.0
  %606 = vmatpush2.msra.mxu0 0.0
  %607 = vmatprep.subr.mxu0 0.0
  %608 = vmatpush2.msra.mxu0 0.0
  %609 = vmatprep.subr.mxu0 0.0
  %610 = vmatpush2.msra.mxu0 0.0
  %611 = vmatprep.subr.mxu0 0.0
  %612 = vmatpush2.msra.mxu0 0.0
  %613 = vmatprep.subr.mxu0 0.0
  %614 = vmatpush2.msra.mxu0 0.0
  %615 = vmatprep.subr.mxu0 0.0
  %616 = vmatpush2.msra.mxu0 0.0
  %617 = vmatprep.subr.mxu0 0.0
  %618 = vmatpush2.msra.mxu0 0.0
  %619 = vmatprep.subr.mxu0 0.0
  %620 = vmatpush2.msra.mxu0 0.0
  %621 = vmatprep.subr.mxu0 0.0
  %622 = vmatpush2.msra.mxu0 0.0
  %623 = vmatprep.subr.mxu0 0.0
  %624 = vmatpush2.msra.mxu0 0.0
  %625 = vmatprep.subr.mxu0 0.0
  %626 = vmatpush2.msra.mxu0 0.0
  %627 = vmatprep.subr.mxu0 0.0
  %628 = vmatpush2.msra.mxu0 0.0
  %629 = vmatprep.mubr.f32.mxu0 0.0
  %630 = vmatmul.mubr.f32.gmra.mxu0 %v563
  %v631 = vpop.f32.mrf.mxu0
  %v632 = vadd.f32 0.0, %v631
  %v633 = vpop.f32.mrf.mxu0
  %634 = vdwg.mxu0
  %v636 = vrot.slane %v632, 2
  %v638 = vadd.f32 %v217, %v636
  %v639 = vxor.u32 %v638, 2147483648
  %v640 = vmul.f32 %v639, 1.442695
  %v641 = vpow.pop %v640
  %v642 = vadd.f32 %v641, 1.0
  %v643 = vrcp.pop %v642
  %v644 = vmul.f32 1.0, %v643
  %v645 = vadd.f32 %v632, %v317
  %v647 = vrot.slane %v645, 2
  %648 = vrot.lane.b32.xlu0 %v647, 64
  %v649 = vpop.permute.xlu0 %648
  %v651 = vmul.f32 %v644, %v649
  %653 = vrot.lane.b32.xlu0 %v651, 64
  %v654 = vpop.permute.xlu0 %653
  %v656 = vadd.f32 %v217, %v654
  %v657 = vtanh.pop %v656
  %v658 = vsub.f32 1.0, %v644
  %660 = vrot.lane.b32.xlu0 %v657, 96
  %v661 = vpop.permute.xlu0 %660
  %v663 = vmul.f32 %v658, %v661
  %v664 = vrot.slane %v558, 6
  %v666 = vmul.f32 %v644, %v664
  %v667 = vadd.f32 %v663, %v666
  %v669 = vrot.slane %v667, 6
  %670 = vrot.lane.b32.xlu0 %v669, 96
  %v671 = vpop.permute.xlu0 %670
  %v672 = vsel %vm143, %v671, 0
  %674 = vmatprep.subr.mxu0 0.0
  %675 = vmatpush1.msra.mxu0 0.0
  %676 = vmatprep.subr.mxu0 0.0
  %677 = vmatpush1.msra.mxu0 0.0
  %678 = vmatprep.subr.mxu0 0.0
  %679 = vmatpush1.msra.mxu0 0.0
  %680 = vmatprep.subr.mxu0 0.0
  %681 = vmatpush1.msra.mxu0 0.0
  %682 = vmatprep.subr.mxu0 0.0
  %683 = vmatpush1.msra.mxu0 0.0
  %684 = vmatprep.subr.mxu0 0.0
  %685 = vmatpush1.msra.mxu0 0.0
  %686 = vmatprep.subr.mxu0 0.0
  %687 = vmatpush1.msra.mxu0 0.0
  %688 = vmatprep.subr.mxu0 0.0
  %689 = vmatpush1.msra.mxu0 0.0
  %690 = vmatprep.subr.mxu0 0.0
  %691 = vmatpush1.msra.mxu0 0.0
  %692 = vmatprep.subr.mxu0 0.0
  %693 = vmatpush1.msra.mxu0 0.0
  %694 = vmatprep.subr.mxu0 0.0
  %695 = vmatpush1.msra.mxu0 0.0
  %696 = vmatprep.subr.mxu0 0.0
  %697 = vmatpush1.msra.mxu0 0.0
  %698 = vmatprep.subr.mxu0 0.0
  %699 = vmatpush1.msra.mxu0 %v228
  %700 = vmatprep.subr.mxu0 0.0
  %701 = vmatpush1.msra.mxu0 %v227
  %702 = vmatprep.subr.mxu0 0.0
  %703 = vmatpush1.msra.mxu0 %v226
  %704 = vmatprep.subr.mxu0 0.0
  %705 = vmatpush1.msra.mxu0 %v225
  %706 = vmatprep.subr.mxu0 0.0
  %707 = vmatpush2.msra.mxu0 0.0
  %708 = vmatprep.subr.mxu0 0.0
  %709 = vmatpush2.msra.mxu0 0.0
  %710 = vmatprep.subr.mxu0 0.0
  %711 = vmatpush2.msra.mxu0 0.0
  %712 = vmatprep.subr.mxu0 0.0
  %713 = vmatpush2.msra.mxu0 0.0
  %714 = vmatprep.subr.mxu0 0.0
  %715 = vmatpush2.msra.mxu0 0.0
  %716 = vmatprep.subr.mxu0 0.0
  %717 = vmatpush2.msra.mxu0 0.0
  %718 = vmatprep.subr.mxu0 0.0
  %719 = vmatpush2.msra.mxu0 0.0
  %720 = vmatprep.subr.mxu0 0.0
  %721 = vmatpush2.msra.mxu0 0.0
  %722 = vmatprep.subr.mxu0 0.0
  %723 = vmatpush2.msra.mxu0 0.0
  %724 = vmatprep.subr.mxu0 0.0
  %725 = vmatpush2.msra.mxu0 0.0
  %726 = vmatprep.subr.mxu0 0.0
  %727 = vmatpush2.msra.mxu0 0.0
  %728 = vmatprep.subr.mxu0 0.0
  %729 = vmatpush2.msra.mxu0 0.0
  %730 = vmatprep.subr.mxu0 0.0
  %731 = vmatpush2.msra.mxu0 0.0
  %732 = vmatprep.subr.mxu0 0.0
  %733 = vmatpush2.msra.mxu0 0.0
  %734 = vmatprep.subr.mxu0 0.0
  %735 = vmatpush2.msra.mxu0 0.0
  %736 = vmatprep.subr.mxu0 0.0
  %737 = vmatpush2.msra.mxu0 0.0
  %738 = vmatprep.mubr.f32.mxu0 0.0
  %739 = vmatmul.mubr.f32.gmra.mxu0 %v672
  %v740 = vpop.f32.mrf.mxu0
  %v741 = vadd.f32 0.0, %v740
  %v742 = vpop.f32.mrf.mxu0
  %743 = vdwg.mxu0
  %v744 = vadd.f32 %v222, %v741
  %v745 = vxor.u32 %v744, 2147483648
  %v746 = vmul.f32 %v745, 1.442695
  %v747 = vpow.pop %v746
  %v748 = vadd.f32 %v747, 1.0
  %v749 = vrcp.pop %v748
  %v750 = vmul.f32 1.0, %v749
  %v751 = vadd.f32 %v741, %v317
  %753 = vrot.lane.b32.xlu0 %v751, 64
  %v754 = vpop.permute.xlu0 %753
  %v756 = vmul.f32 %v750, %v754
  %758 = vrot.lane.b32.xlu0 %v756, 64
  %v759 = vpop.permute.xlu0 %758
  %v761 = vadd.f32 %v222, %v759
  %v762 = vtanh.pop %v761
  %v763 = vsub.f32 1.0, %v750
  %765 = vrot.lane.b32.xlu0 %v762, 96
  %v766 = vpop.permute.xlu0 %765
  %v768 = vmul.f32 %v763, %v766
  %v770 = vmul.f32 %v750, %v669
  %v771 = vadd.f32 %v768, %v770
  %773 = vrot.lane.b32.xlu0 %v771, 96
  %v774 = vpop.permute.xlu0 %773
  %v775 = vsel %vm143, %v774, 0
  %777 = vmatprep.subr.mxu0 0.0
  %778 = vmatpush1.msra.mxu0 0.0
  %779 = vmatprep.subr.mxu0 0.0
  %780 = vmatpush1.msra.mxu0 0.0
  %781 = vmatprep.subr.mxu0 0.0
  %782 = vmatpush1.msra.mxu0 0.0
  %783 = vmatprep.subr.mxu0 0.0
  %784 = vmatpush1.msra.mxu0 0.0
  %785 = vmatprep.subr.mxu0 0.0
  %786 = vmatpush1.msra.mxu0 0.0
  %787 = vmatprep.subr.mxu0 0.0
  %788 = vmatpush1.msra.mxu0 0.0
  %789 = vmatprep.subr.mxu0 0.0
  %790 = vmatpush1.msra.mxu0 0.0
  %791 = vmatprep.subr.mxu0 0.0
  %792 = vmatpush1.msra.mxu0 0.0
  %793 = vmatprep.subr.mxu0 0.0
  %794 = vmatpush1.msra.mxu0 0.0
  %795 = vmatprep.subr.mxu0 0.0
  %796 = vmatpush1.msra.mxu0 0.0
  %797 = vmatprep.subr.mxu0 0.0
  %798 = vmatpush1.msra.mxu0 0.0
  %799 = vmatprep.subr.mxu0 0.0
  %800 = vmatpush1.msra.mxu0 0.0
  %801 = vmatprep.subr.mxu0 0.0
  %802 = vmatpush1.msra.mxu0 %v228
  %803 = vmatprep.subr.mxu0 0.0
  %804 = vmatpush1.msra.mxu0 %v227
  %805 = vmatprep.subr.mxu0 0.0
  %806 = vmatpush1.msra.mxu0 %v226
  %807 = vmatprep.subr.mxu0 0.0
  %808 = vmatpush1.msra.mxu0 %v225
  %809 = vmatprep.subr.mxu0 0.0
  %810 = vmatpush2.msra.mxu0 0.0
  %811 = vmatprep.subr.mxu0 0.0
  %812 = vmatpush2.msra.mxu0 0.0
  %813 = vmatprep.subr.mxu0 0.0
  %814 = vmatpush2.msra.mxu0 0.0
  %815 = vmatprep.subr.mxu0 0.0
  %816 = vmatpush2.msra.mxu0 0.0
  %817 = vmatprep.subr.mxu0 0.0
  %818 = vmatpush2.msra.mxu0 0.0
  %819 = vmatprep.subr.mxu0 0.0
  %820 = vmatpush2.msra.mxu0 0.0
  %821 = vmatprep.subr.mxu0 0.0
  %822 = vmatpush2.msra.mxu0 0.0
  %823 = vmatprep.subr.mxu0 0.0
  %824 = vmatpush2.msra.mxu0 0.0
  %825 = vmatprep.subr.mxu0 0.0
  %826 = vmatpush2.msra.mxu0 0.0
  %827 = vmatprep.subr.mxu0 0.0
  %828 = vmatpush2.msra.mxu0 0.0
  %829 = vmatprep.subr.mxu0 0.0
  %830 = vmatpush2.msra.mxu0 0.0
  %831 = vmatprep.subr.mxu0 0.0
  %832 = vmatpush2.msra.mxu0 0.0
  %833 = vmatprep.subr.mxu0 0.0
  %834 = vmatpush2.msra.mxu0 0.0
  %835 = vmatprep.subr.mxu0 0.0
  %836 = vmatpush2.msra.mxu0 0.0
  %837 = vmatprep.subr.mxu0 0.0
  %838 = vmatpush2.msra.mxu0 0.0
  %839 = vmatprep.subr.mxu0 0.0
  %840 = vmatpush2.msra.mxu0 0.0
  %841 = vmatprep.mubr.f32.mxu0 0.0
  %842 = vmatmul.mubr.f32.gmra.mxu0 %v775
  %v843 = vpop.f32.mrf.mxu0
  %v844 = vadd.f32 0.0, %v843
  %v845 = vpop.f32.mrf.mxu0
  %846 = vdwg.mxu0
  %v848 = vrot.slane %v844, 6
  %v850 = vadd.f32 %v222, %v848
  %v851 = vxor.u32 %v850, 2147483648
  %v852 = vmul.f32 %v851, 1.442695
  %v853 = vpow.pop %v852
  %v854 = vadd.f32 %v853, 1.0
  %v855 = vrcp.pop %v854
  %v856 = vmul.f32 1.0, %v855
  %v857 = vadd.f32 %v844, %v317
  %v859 = vrot.slane %v857, 6
  %860 = vrot.lane.b32.xlu0 %v859, 64
  %v861 = vpop.permute.xlu0 %860
  %v863 = vmul.f32 %v856, %v861
  %865 = vrot.lane.b32.xlu0 %v863, 64
  %v866 = vpop.permute.xlu0 %865
  %v868 = vadd.f32 %v222, %v866
  %v869 = vtanh.pop %v868
  %v870 = vsub.f32 1.0, %v856
  %872 = vrot.lane.b32.xlu0 %v869, 96
  %v873 = vpop.permute.xlu0 %872
  %v875 = vmul.f32 %v870, %v873
  %v876 = vrot.slane %v771, 6
  %v878 = vmul.f32 %v856, %v876
  %v879 = vadd.f32 %v875, %v878
  %v881 = vrot.slane %v879, 2
  %882 = vrot.lane.b32.xlu0 %v881, 96
  %v883 = vpop.permute.xlu0 %882
  %v884 = vsel %vm143, %v883, 0
  %886 = vmatprep.subr.mxu0 0.0
  %887 = vmatpush1.msra.mxu0 0.0
  %888 = vmatprep.subr.mxu0 0.0
  %889 = vmatpush1.msra.mxu0 0.0
  %890 = vmatprep.subr.mxu0 0.0
  %891 = vmatpush1.msra.mxu0 0.0
  %892 = vmatprep.subr.mxu0 0.0
  %893 = vmatpush1.msra.mxu0 0.0
  %894 = vmatprep.subr.mxu0 0.0
  %895 = vmatpush1.msra.mxu0 0.0
  %896 = vmatprep.subr.mxu0 0.0
  %897 = vmatpush1.msra.mxu0 0.0
  %898 = vmatprep.subr.mxu0 0.0
  %899 = vmatpush1.msra.mxu0 0.0
  %900 = vmatprep.subr.mxu0 0.0
  %901 = vmatpush1.msra.mxu0 0.0
  %902 = vmatprep.subr.mxu0 0.0
  %903 = vmatpush1.msra.mxu0 0.0
  %904 = vmatprep.subr.mxu0 0.0
  %905 = vmatpush1.msra.mxu0 0.0
  %906 = vmatprep.subr.mxu0 0.0
  %907 = vmatpush1.msra.mxu0 0.0
  %908 = vmatprep.subr.mxu0 0.0
  %909 = vmatpush1.msra.mxu0 0.0
  %910 = vmatprep.subr.mxu0 0.0
  %911 = vmatpush1.msra.mxu0 %v228
  %912 = vmatprep.subr.mxu0 0.0
  %913 = vmatpush1.msra.mxu0 %v227
  %914 = vmatprep.subr.mxu0 0.0
  %915 = vmatpush1.msra.mxu0 %v226
  %916 = vmatprep.subr.mxu0 0.0
  %917 = vmatpush1.msra.mxu0 %v225
  %918 = vmatprep.subr.mxu0 0.0
  %919 = vmatpush2.msra.mxu0 0.0
  %920 = vmatprep.subr.mxu0 0.0
  %921 = vmatpush2.msra.mxu0 0.0
  %922 = vmatprep.subr.mxu0 0.0
  %923 = vmatpush2.msra.mxu0 0.0
  %924 = vmatprep.subr.mxu0 0.0
  %925 = vmatpush2.msra.mxu0 0.0
  %926 = vmatprep.subr.mxu0 0.0
  %927 = vmatpush2.msra.mxu0 0.0
  %928 = vmatprep.subr.mxu0 0.0
  %929 = vmatpush2.msra.mxu0 0.0
  %930 = vmatprep.subr.mxu0 0.0
  %931 = vmatpush2.msra.mxu0 0.0
  %932 = vmatprep.subr.mxu0 0.0
  %933 = vmatpush2.msra.mxu0 0.0
  %934 = vmatprep.subr.mxu0 0.0
  %935 = vmatpush2.msra.mxu0 0.0
  %936 = vmatprep.subr.mxu0 0.0
  %937 = vmatpush2.msra.mxu0 0.0
  %938 = vmatprep.subr.mxu0 0.0
  %939 = vmatpush2.msra.mxu0 0.0
  %940 = vmatprep.subr.mxu0 0.0
  %941 = vmatpush2.msra.mxu0 0.0
  %942 = vmatprep.subr.mxu0 0.0
  %943 = vmatpush2.msra.mxu0 0.0
  %944 = vmatprep.subr.mxu0 0.0
  %945 = vmatpush2.msra.mxu0 0.0
  %946 = vmatprep.subr.mxu0 0.0
  %947 = vmatpush2.msra.mxu0 0.0
  %948 = vmatprep.subr.mxu0 0.0
  %949 = vmatpush2.msra.mxu0 0.0
  %950 = vmatprep.mubr.f32.mxu0 0.0
  %951 = vmatmul.mubr.f32.gmra.mxu0 %v884
  %v952 = vpop.f32.mrf.mxu0
  %v953 = vadd.f32 0.0, %v952
  %v954 = vpop.f32.mrf.mxu0
  %955 = vdwg.mxu0
  %v957 = vrot.slane %v953, 4
  %v959 = vadd.f32 %v222, %v957
  %v960 = vxor.u32 %v959, 2147483648
  %v961 = vmul.f32 %v960, 1.442695
  %v962 = vpow.pop %v961
  %v963 = vadd.f32 %v962, 1.0
  %v964 = vrcp.pop %v963
  %v965 = vmul.f32 1.0, %v964
  %v966 = vadd.f32 %v953, %v317
  %v968 = vrot.slane %v966, 4
  %969 = vrot.lane.b32.xlu0 %v968, 64
  %v970 = vpop.permute.xlu0 %969
  %v972 = vmul.f32 %v965, %v970
  %974 = vrot.lane.b32.xlu0 %v972, 64
  %v975 = vpop.permute.xlu0 %974
  %v977 = vadd.f32 %v222, %v975
  %v978 = vtanh.pop %v977
  %v979 = vsub.f32 1.0, %v965
  %981 = vrot.lane.b32.xlu0 %v978, 96
  %v982 = vpop.permute.xlu0 %981
  %v984 = vmul.f32 %v979, %v982
  %v985 = vrot.slane %v879, 6
  %v987 = vmul.f32 %v965, %v985
  %v988 = vadd.f32 %v984, %v987
  %v990 = vrot.slane %v988, 4
  %991 = vrot.lane.b32.xlu0 %v990, 96
  %v992 = vpop.permute.xlu0 %991
  %v993 = vsel %vm143, %v992, 0
  %995 = vmatprep.subr.mxu0 0.0
  %996 = vmatpush1.msra.mxu0 0.0
  %997 = vmatprep.subr.mxu0 0.0
  %998 = vmatpush1.msra.mxu0 0.0
  %999 = vmatprep.subr.mxu0 0.0
  %1000 = vmatpush1.msra.mxu0 0.0
  %1001 = vmatprep.subr.mxu0 0.0
  %1002 = vmatpush1.msra.mxu0 0.0
  %1003 = vmatprep.subr.mxu0 0.0
  %1004 = vmatpush1.msra.mxu0 0.0
  %1005 = vmatprep.subr.mxu0 0.0
  %1006 = vmatpush1.msra.mxu0 0.0
  %1007 = vmatprep.subr.mxu0 0.0
  %1008 = vmatpush1.msra.mxu0 0.0
  %1009 = vmatprep.subr.mxu0 0.0
  %1010 = vmatpush1.msra.mxu0 0.0
  %1011 = vmatprep.subr.mxu0 0.0
  %1012 = vmatpush1.msra.mxu0 0.0
  %1013 = vmatprep.subr.mxu0 0.0
  %1014 = vmatpush1.msra.mxu0 0.0
  %1015 = vmatprep.subr.mxu0 0.0
  %1016 = vmatpush1.msra.mxu0 0.0
  %1017 = vmatprep.subr.mxu0 0.0
  %1018 = vmatpush1.msra.mxu0 0.0
  %1019 = vmatprep.subr.mxu0 0.0
  %1020 = vmatpush1.msra.mxu0 %v228
  %1021 = vmatprep.subr.mxu0 0.0
  %1022 = vmatpush1.msra.mxu0 %v227
  %1023 = vmatprep.subr.mxu0 0.0
  %1024 = vmatpush1.msra.mxu0 %v226
  %1025 = vmatprep.subr.mxu0 0.0
  %1026 = vmatpush1.msra.mxu0 %v225
  %1027 = vmatprep.subr.mxu0 0.0
  %1028 = vmatpush2.msra.mxu0 0.0
  %1029 = vmatprep.subr.mxu0 0.0
  %1030 = vmatpush2.msra.mxu0 0.0
  %1031 = vmatprep.subr.mxu0 0.0
  %1032 = vmatpush2.msra.mxu0 0.0
  %1033 = vmatprep.subr.mxu0 0.0
  %1034 = vmatpush2.msra.mxu0 0.0
  %1035 = vmatprep.subr.mxu0 0.0
  %1036 = vmatpush2.msra.mxu0 0.0
  %1037 = vmatprep.subr.mxu0 0.0
  %1038 = vmatpush2.msra.mxu0 0.0
  %1039 = vmatprep.subr.mxu0 0.0
  %1040 = vmatpush2.msra.mxu0 0.0
  %1041 = vmatprep.subr.mxu0 0.0
  %1042 = vmatpush2.msra.mxu0 0.0
  %1043 = vmatprep.subr.mxu0 0.0
  %1044 = vmatpush2.msra.mxu0 0.0
  %1045 = vmatprep.subr.mxu0 0.0
  %1046 = vmatpush2.msra.mxu0 0.0
  %1047 = vmatprep.subr.mxu0 0.0
  %1048 = vmatpush2.msra.mxu0 0.0
  %1049 = vmatprep.subr.mxu0 0.0
  %1050 = vmatpush2.msra.mxu0 0.0
  %1051 = vmatprep.subr.mxu0 0.0
  %1052 = vmatpush2.msra.mxu0 0.0
  %1053 = vmatprep.subr.mxu0 0.0
  %1054 = vmatpush2.msra.mxu0 0.0
  %1055 = vmatprep.subr.mxu0 0.0
  %1056 = vmatpush2.msra.mxu0 0.0
  %1057 = vmatprep.subr.mxu0 0.0
  %1058 = vmatpush2.msra.mxu0 0.0
  %1059 = vmatprep.mubr.f32.mxu0 0.0
  %1060 = vmatmul.mubr.f32.gmra.mxu0 %v993
  %v1061 = vpop.f32.mrf.mxu0
  %v1062 = vadd.f32 0.0, %v1061
  %v1063 = vpop.f32.mrf.mxu0
  %1064 = vdwg.mxu0
  %v1066 = vrot.slane %v1062, 2
  %v1068 = vadd.f32 %v222, %v1066
  %v1069 = vxor.u32 %v1068, 2147483648
  %v1070 = vmul.f32 %v1069, 1.442695
  %v1071 = vpow.pop %v1070
  %v1072 = vadd.f32 %v1071, 1.0
  %v1073 = vrcp.pop %v1072
  %v1074 = vmul.f32 1.0, %v1073
  %v1075 = vadd.f32 %v1062, %v317
  %v1077 = vrot.slane %v1075, 2
  %1078 = vrot.lane.b32.xlu0 %v1077, 64
  %v1079 = vpop.permute.xlu0 %1078
  %v1081 = vmul.f32 %v1074, %v1079
  %1083 = vrot.lane.b32.xlu0 %v1081, 64
  %v1084 = vpop.permute.xlu0 %1083
  %v1086 = vadd.f32 %v222, %v1084
  %v1087 = vtanh.pop %v1086
  %v1088 = vsub.f32 1.0, %v1074
  %1090 = vrot.lane.b32.xlu0 %v1087, 96
  %v1091 = vpop.permute.xlu0 %1090
  %v1093 = vmul.f32 %v1088, %v1091
  %v1094 = vrot.slane %v988, 6
  %v1096 = vmul.f32 %v1074, %v1094
  %v1097 = vadd.f32 %v1093, %v1096
  %vm1098 = vcmask 1041408
  %v1099 = vsel %vm1098, %v341, %v449
  %vm1100 = vcmask 1043456
  %v1101 = vsel %vm1100, %v1099, %v558
  %vm1102 = vcmask 1045504
  %v1103 = vsel %vm1102, %v1101, %v667
  %v1104 = vsel %vm1098, %v771, %v879
  %v1105 = vsel %vm1100, %v1104, %v988
  %v1106 = vsel %vm1102, %v1105, %v1097
  %1109 = vrot.lane.b32.xlu0 %v1103, 96
  %v1110 = vpop.permute.xlu0 %1109
  %1111 = vrot.lane.b32.xlu0 %v1106, 96
  %v1112 = vpop.permute.xlu0 %1111
  %1115 = vst.msk [vmem:[%s10] sm:$0xff] %vm143, %v1110
  %1116 = vst.msk [vmem:[%s10 + $0x8] sm:$0xff] %vm143, %v1112
  %v1117 = vld [vmem:[%s8] sm:$0xff]
  %v1118 = vld [vmem:[%s8 + $0x8] sm:$0xff]
  %v1119 = vld [vmem:[%s8 + $0x10] sm:$0xff]
  %v1120 = vld [vmem:[%s8 + $0x18] sm:$0xff]
  %v1121 = vld [vmem:[%s9] sm:$0x1]
  %v1123 = vlaneseq
  %v1124 = vshrl.u32 %v1123, 7
  %v1125 = vsub.s32 0, %v1124
  %v1126 = vrot.slane %v1121, %v1125
  %v1128 = vsel %vm143, %v1110, 0
  %v1130 = vsel %vm143, %v1112, 0
  %1132 = vmatprep.subr.mxu0 0.0
  %1133 = vmatpush1.msra.mxu0 0.0
  %1134 = vmatprep.subr.mxu0 0.0
  %1135 = vmatpush1.msra.mxu0 0.0
  %1136 = vmatprep.subr.mxu0 0.0
  %1137 = vmatpush1.msra.mxu0 0.0
  %1138 = vmatprep.subr.mxu0 0.0
  %1139 = vmatpush1.msra.mxu0 0.0
  %1140 = vmatprep.subr.mxu0 0.0
  %1141 = vmatpush1.msra.mxu0 0.0
  %1142 = vmatprep.subr.mxu0 0.0
  %1143 = vmatpush1.msra.mxu0 0.0
  %1144 = vmatprep.subr.mxu0 0.0
  %1145 = vmatpush1.msra.mxu0 0.0
  %1146 = vmatprep.subr.mxu0 0.0
  %1147 = vmatpush1.msra.mxu0 0.0
  %1148 = vmatprep.subr.mxu0 0.0
  %1149 = vmatpush1.msra.mxu0 0.0
  %1150 = vmatprep.subr.mxu0 0.0
  %1151 = vmatpush1.msra.mxu0 0.0
  %1152 = vmatprep.subr.mxu0 0.0
  %1153 = vmatpush1.msra.mxu0 0.0
  %1154 = vmatprep.subr.mxu0 0.0
  %1155 = vmatpush1.msra.mxu0 0.0
  %1156 = vmatprep.subr.mxu0 0.0
  %1157 = vmatpush1.msra.mxu0 %v1120
  %1158 = vmatprep.subr.mxu0 0.0
  %1159 = vmatpush1.msra.mxu0 %v1119
  %1160 = vmatprep.subr.mxu0 0.0
  %1161 = vmatpush1.msra.mxu0 %v1118
  %1162 = vmatprep.subr.mxu0 0.0
  %1163 = vmatpush1.msra.mxu0 %v1117
  %1164 = vmatprep.subr.mxu0 0.0
  %1165 = vmatpush2.msra.mxu0 0.0
  %1166 = vmatprep.subr.mxu0 0.0
  %1167 = vmatpush2.msra.mxu0 0.0
  %1168 = vmatprep.subr.mxu0 0.0
  %1169 = vmatpush2.msra.mxu0 0.0
  %1170 = vmatprep.subr.mxu0 0.0
  %1171 = vmatpush2.msra.mxu0 0.0
  %1172 = vmatprep.subr.mxu0 0.0
  %1173 = vmatpush2.msra.mxu0 0.0
  %1174 = vmatprep.subr.mxu0 0.0
  %1175 = vmatpush2.msra.mxu0 0.0
  %1176 = vmatprep.subr.mxu0 0.0
  %1177 = vmatpush2.msra.mxu0 0.0
  %1178 = vmatprep.subr.mxu0 0.0
  %1179 = vmatpush2.msra.mxu0 0.0
  %1180 = vmatprep.subr.mxu0 0.0
  %1181 = vmatpush2.msra.mxu0 0.0
  %1182 = vmatprep.subr.mxu0 0.0
  %1183 = vmatpush2.msra.mxu0 0.0
  %1184 = vmatprep.subr.mxu0 0.0
  %1185 = vmatpush2.msra.mxu0 0.0
  %1186 = vmatprep.subr.mxu0 0.0
  %1187 = vmatpush2.msra.mxu0 0.0
  %1188 = vmatprep.subr.mxu0 0.0
  %1189 = vmatpush2.msra.mxu0 0.0
  %1190 = vmatprep.subr.mxu0 0.0
  %1191 = vmatpush2.msra.mxu0 0.0
  %1192 = vmatprep.subr.mxu0 0.0
  %1193 = vmatpush2.msra.mxu0 0.0
  %1194 = vmatprep.subr.mxu0 0.0
  %1195 = vmatpush2.msra.mxu0 0.0
  %1196 = vmatprep.mubr.f32.mxu0 0.0
  %1197 = vmatmul.mubr.f32.gmra.mxu0 %v1128
  %v1198 = vpop.f32.mrf.mxu0
  %v1199 = vadd.f32 %v1126, %v1198
  %v1200 = vpop.f32.mrf.mxu0
  %1201 = vmatprep.mubr.f32.mxu0 0.0
  %1202 = vmatmul.mubr.f32.gmra.mxu0 %v1130
  %v1203 = vpop.f32.mrf.mxu0
  %v1204 = vadd.f32 %v1126, %v1203
  %v1205 = vpop.f32.mrf.mxu0
  %1206 = vdwg.mxu0
  %vm1207 = vcmask 72704
  %1208 = vst.msk [vmem:[%s11] sm:$0xff] %vm1207, %v1199
  %1209 = vst.msk [vmem:[%s11 + $0x8] sm:$0xff] %vm1207, %v1204
  // Predicated region
  $region42: #{rnn_forward.1} parent=0 // pred_check
    _
  $region43: #{rnn_forward.1} parent=0 // pred_check_branch
    %1211 = sbr.rel (0) target = $region45
  $region44: #{rnn_forward.1} parent=0 // pred_region
    _
  $region45: #{rnn_forward.1} parent=0 // pred_fallthru
    _
  // Predicated region
  $region46: #{rnn_forward.1} parent=0 // pred_check
    _
  $region47: #{rnn_forward.1} parent=0 // pred_check_branch
    %1213 = sbr.rel (0) target = $region49
  $region48: #{rnn_forward.1} parent=0 // pred_region
    _
  $region49: #{rnn_forward.1} parent=0 // pred_fallthru
    _
  // Predicated region
  $region50: #{rnn_forward.1} parent=0 // pred_check
    _
  $region51: #{rnn_forward.1} parent=0 // pred_check_branch
    %1215 = sbr.rel (0) target = $region53
  $region52: #{rnn_forward.1} parent=0 // pred_region
    _
  $region53: #{rnn_forward.1} parent=0 // pred_fallthru
    _
  // Predicated region
  $region54: #{rnn_forward.1} parent=0 // pred_check
    _
  $region55: #{rnn_forward.1} parent=0 // pred_check_branch
    %1217 = sbr.rel (0) target = $region57
  $region56: #{rnn_forward.1} parent=0 // pred_region
    _
  $region57: #{rnn_forward.1} parent=0 // pred_fallthru
    _

</llo_original>
